<compile_context>
chip_gen: v7x
topology: tpu7x:2x2x1
jax: 0.10.0
libtpu: 0.0.40
codegen_flags: <defaults>
</compile_context>

<pallas_src>
import numpy as np
import jax
import jax.numpy as jnp
from jax.experimental import pallas as pl
from jax.experimental.pallas import tpu as pltpu

N_ACTIONS = 3
EMB = 3 * 3 * 32  # 288
HID = 144


# ----------------------------- fused Pallas kernel -----------------------------
#
# In-kernel activation layouts (all 2-D, bf16, 128 lanes):
#   a1: (16B, 128)  row = (h1 % 4)*4B + (h1 // 4)*B + b , lanes = ow1*8  + c1
#   a2: (7B, 128)   rows [0,4B) = oh2 even, [4B,7B) = oh2 odd (oh2//2 major,
#                   b minor),                lanes = ow2*16 + c2 (112..127 = 0)
#   a3: (3B, 128)   row = oh3*B + b ,        lanes = ow3*32 + c3 (96..127  = 0)
#
# Conv weights are pre-expanded on the host into per-row-tap block matrices so
# each conv stage is a handful of contiguous-slice matmuls accumulated over kh.

def _image_ac_fused_kernel(obs_ref, w1_ref, b1_ref,
                           w2_ref, b2_ref,
                           w3_ref, b3_ref,
                           wh1_ref, bh1_ref, wh2_ref, bh2_ref,
                           out_ref,
                           a1_ref, a2_ref, a3_ref):
    f32 = jnp.float32
    bf16 = jnp.bfloat16
    B = out_ref.shape[0]

    # ---- conv1 (3->8, 3x3, stride 3): non-overlapping => ONE matmul ----------
    # obs_ref: (16B, 432) bf16 already in (h1%4, h1//4, b) row order.
    a1 = jnp.dot(obs_ref[...], w1_ref[...], preferred_element_type=f32)
    a1_ref[...] = jnp.maximum(a1 + b1_ref[...], 0.0).astype(bf16)

    # ---- conv2 (8->16, 4x4, stride 2): batched taps, contiguous slices --------
    # even output rows (oh2 in {0,2,4,6}): tap kh reads a1 region kh in full.
    accE = jnp.dot(a1_ref[pl.ds(0, 4 * B), :], w2_ref[0],
                   preferred_element_type=f32)
    for kh in range(1, 4):
        accE = accE + jnp.dot(a1_ref[pl.ds(kh * 4 * B, 4 * B), :], w2_ref[kh],
                              preferred_element_type=f32)
    a2_ref[pl.ds(0, 4 * B), :] = jnp.maximum(accE + b2_ref[...], 0.0).astype(bf16)

    # odd output rows (oh2 in {1,3,5}).
    o_slices = ((2 * 4 * B, 0), (3 * 4 * B, 1), (B, 2), (5 * B, 3))
    start, kh = o_slices[0]
    accO = jnp.dot(a1_ref[pl.ds(start, 3 * B), :], w2_ref[kh],
                   preferred_element_type=f32)
    for start, kh in o_slices[1:]:
        accO = accO + jnp.dot(a1_ref[pl.ds(start, 3 * B), :], w2_ref[kh],
                              preferred_element_type=f32)
    a2_ref[pl.ds(4 * B, 3 * B), :] = jnp.maximum(accO + b2_ref[...], 0.0).astype(bf16)

    # ---- conv3 (16->32, 3x3, stride 2): 3 batched taps, contiguous slices -----
    # TODO(synk): on v6e/v7x the 3 taps could be fused along K (K=384) to halve
    # MXU pushes; kept as accumulate-over-taps so the same code maps well to v5e.
    acc3 = jnp.dot(a2_ref[pl.ds(0, 3 * B), :], w3_ref[0],
                   preferred_element_type=f32)
    acc3 = acc3 + jnp.dot(a2_ref[pl.ds(4 * B, 3 * B), :], w3_ref[1],
                          preferred_element_type=f32)
    acc3 = acc3 + jnp.dot(a2_ref[pl.ds(B, 3 * B), :], w3_ref[2],
                          preferred_element_type=f32)
    a3_ref[...] = jnp.maximum(acc3 + b3_ref[...], 0.0).astype(bf16)

    # ---- heads: fused actor|critic 288->288 (padded to 384), per-oh3 blocks ---
    # The PyTorch NCHW flatten is folded into wh1's row order (host side).
    h = jnp.dot(a3_ref[pl.ds(0, B), :], wh1_ref[0], preferred_element_type=f32)
    for oh3 in range(1, 3):
        h = h + jnp.dot(a3_ref[pl.ds(oh3 * B, B), :], wh1_ref[oh3],
                        preferred_element_type=f32)
    h = jnp.maximum(h + bh1_ref[...], 0.0)                       # (B, 384) f32

    # block-diagonal second layer, padded to 128 lanes:
    # cols 0..2 = actor logits, col 3 = critic value, cols 4.. = 0.
    out = jnp.dot(h.astype(bf16), wh2_ref[...],
                  preferred_element_type=f32) + bh2_ref[...]     # (B, 128) f32

    # lane-dense masked log_softmax over the 3 logit lanes; col 3 left as value.
    col = jax.lax.broadcasted_iota(jnp.int32, out.shape, 1)
    is_logit = col < N_ACTIONS
    neg = jnp.float32(-1e30)
    masked = jnp.where(is_logit, out, neg)
    m = jnp.max(masked, axis=1, keepdims=True)
    e = jnp.exp(masked - m)                  # pad / value lanes -> exp(-1e30) = 0
    lse = m + jnp.log(jnp.sum(e, axis=1, keepdims=True))
    out_ref[...] = jnp.where(is_logit, out - lse, out)


@jax.jit
def image_ac_forward(params, obs):
    """obs: (B, 48, 48, 3) NHWC float. Returns (log_softmax logits (B,3), value (B,))."""
    b = obs.shape[0]
    # Lane-dense 2-D view, rows in (h1 % 4, h1 // 4, b) order, cols (kh, w, c)=432.
    # Pure layout plumbing (reshape/transpose) done once in the wrapper.
    obs2 = (obs.astype(jnp.float32)
            .reshape(b, 4, 4, 3 * 48 * 3)      # (b, h1//4, h1%4, 432)
            .transpose(2, 1, 0, 3)             # (h1%4, h1//4, b, 432)
            .reshape(16 * b, 432)
            .astype(jnp.bfloat16))

    vmem = lambda: pl.BlockSpec(memory_space=pltpu.MemorySpace.VMEM)
    # TODO(synk): if batch grows past ~8, add a leading batch grid axis with
    # dimension_semantics=("parallel",) so v7x's second TensorCore is used.
    slab = pl.pallas_call(
        _image_ac_fused_kernel,
        out_shape=jax.ShapeDtypeStruct((b, 128), jnp.float32),
        in_specs=[vmem() for _ in range(11)],
        out_specs=vmem(),
        scratch_shapes=[
            pltpu.VMEM((16 * b, 128), jnp.bfloat16),   # conv1 output
            pltpu.VMEM((7 * b, 128), jnp.bfloat16),    # conv2 output (lane-padded)
            pltpu.VMEM((3 * b, 128), jnp.bfloat16),    # conv3 output (lane-padded)
        ],
        compiler_params=pltpu.CompilerParams(vmem_limit_bytes=8 * 1024 * 1024),
        cost_estimate=pl.CostEstimate(flops=7_000_000, transcendentals=32,
                                      bytes_accessed=900_000),
    )(obs2,
      params["w1m"], params["b1r"],
      params["w2m"], params["b2r"],
      params["w3m"], params["b3r"],
      params["wh1"], params["bh1"], params["wh2"], params["bh2"])
    return slab[:, :N_ACTIONS], slab[:, N_ACTIONS]   # logits, value (= squeeze(1))


# ------------------------- parameter init & host-side packing -------------------------

def init_params(key):
    ks = jax.random.split(key, 14)

    def uni(k, shape, fan_in):
        bound = 1.0 / jnp.sqrt(jnp.float32(fan_in))
        return jax.random.uniform(k, shape, jnp.float32, -bound, bound)

    p = {}
    p["w1"] = uni(ks[0], (8, 3, 3, 3), 3 * 3 * 3)      # OIHW, like PyTorch
    p["b1"] = uni(ks[1], (8,), 3 * 3 * 3)
    p["w2"] = uni(ks[2], (16, 8, 4, 4), 8 * 4 * 4)
    p["b2"] = uni(ks[3], (16,), 8 * 4 * 4)
    p["w3"] = uni(ks[4], (32, 16, 3, 3), 16 * 3 * 3)
    p["b3"] = uni(ks[5], (32,), 16 * 3 * 3)
    # linear weights stored (in, out); PyTorch stores (out, in) and does x @ W.T
    p["wa1"] = uni(ks[6], (EMB, HID), EMB)
    p["ba1"] = uni(ks[7], (HID,), EMB)
    p["wa2"] = uni(ks[8], (HID, N_ACTIONS), HID)
    p["ba2"] = uni(ks[9], (N_ACTIONS,), HID)
    p["wc1"] = uni(ks[10], (EMB, HID), EMB)
    p["bc1"] = uni(ks[11], (HID,), EMB)
    p["wc2"] = uni(ks[12], (HID, 1), HID)
    p["bc2"] = uni(ks[13], (1,), HID)
    return p


def build_kernel_params(p):
    """Pre-expand conv weights into (zero-padded) block matrices, fold the NCHW
    flatten into the head weights and fuse actor|critic.  One-time host work;
    packed matmul weights are stored bf16, biases stay f32."""
    w1 = np.asarray(p["w1"], np.float32)   # (8, 3, 3, 3)
    w2 = np.asarray(p["w2"], np.float32)   # (16, 8, 4, 4)
    w3 = np.asarray(p["w3"], np.float32)   # (32, 16, 3, 3)

    # conv1 block weight: (kh*W*C, OW1*C1) = (432, 128)
    w1m = np.zeros((3 * 48 * 3, 16 * 8), np.float32)
    for i in range(3):
        for ow in range(16):
            for j in range(3):
                w_in = 3 * ow + j
                w1m[i * 144 + w_in * 3: i * 144 + w_in * 3 + 3,
                    ow * 8:(ow + 1) * 8] = w1[:, :, i, j].T          # (c, co)
    b1r = np.tile(np.asarray(p["b1"], np.float32), 16)[None, :]      # (1, 128)

    # conv2 per-tap block weights: (4, 128, 128), N padded 112->128 with zeros
    w2m = np.zeros((4, 128, 128), np.float32)
    for i in range(4):
        for ow in range(7):
            for j in range(4):
                w_in = 2 * ow + j
                w2m[i, w_in * 8:(w_in + 1) * 8,
                    ow * 16:(ow + 1) * 16] = w2[:, :, i, j].T        # (c, co)
    b2r = np.zeros((1, 128), np.float32)
    b2r[0, :112] = np.tile(np.asarray(p["b2"], np.float32), 7)

    # conv3 per-tap block weights: (3, 128, 128), K padded 112->128, N 96->128
    w3m = np.zeros((3, 128, 128), np.float32)
    for i in range(3):
        for ow in range(3):
            for j in range(3):
                w_in = 2 * ow + j
                w3m[i, w_in * 16:(w_in + 1) * 16,
                    ow * 32:(ow + 1) * 32] = w3[:, :, i, j].T        # (c, co)
    b3r = np.zeros((1, 128), np.float32)
    b3r[0, :96] = np.tile(np.asarray(p["b3"], np.float32), 3)

    # Heads: per-oh3 blocks; row (ow3*32 + c3) of block oh3 = PyTorch NCHW-flat
    # index c3*9 + oh3*3 + ow3.  Actor|critic concatenated, N padded 288->384.
    wcat = np.concatenate([np.asarray(p["wa1"], np.float32),
                           np.asarray(p["wc1"], np.float32)], axis=1)  # (288,288)
    idx = np.arange(EMB).reshape(32, 3, 3)          # [c3, h3, w3] -> NCHW index
    wh1 = np.zeros((3, 128, 384), np.float32)
    for oh3 in range(3):
        rows = idx[:, oh3, :].T.reshape(-1)          # order (ow3, c3) -> 96 rows
        wh1[oh3, :96, :288] = wcat[rows, :]
    bh1 = np.zeros((1, 384), np.float32)
    bh1[0, :288] = np.concatenate([np.asarray(p["ba1"], np.float32),
                                   np.asarray(p["bc1"], np.float32)])

    # block-diagonal second layer: cols 0..2 actor logits, col 3 critic value.
    wh2 = np.zeros((384, 128), np.float32)
    wh2[:HID, :N_ACTIONS] = np.asarray(p["wa2"], np.float32)
    wh2[HID:2 * HID, N_ACTIONS:N_ACTIONS + 1] = np.asarray(p["wc2"], np.float32)
    bh2 = np.zeros((1, 128), np.float32)
    bh2[0, :N_ACTIONS] = np.asarray(p["ba2"], np.float32)
    bh2[0, N_ACTIONS] = np.asarray(p["bc2"], np.float32)[0]

    bf = jnp.bfloat16
    out = dict(p)
    out.update(
        w1m=jnp.asarray(w1m, bf), b1r=jnp.asarray(b1r),
        w2m=jnp.asarray(w2m, bf), b2r=jnp.asarray(b2r),
        w3m=jnp.asarray(w3m, bf), b3r=jnp.asarray(b3r),
        wh1=jnp.asarray(wh1, bf), bh1=jnp.asarray(bh1),
        wh2=jnp.asarray(wh2, bf), bh2=jnp.asarray(bh2),
    )
    return out


# ----------------------------- pure-JAX reference -----------------------------

def reference_forward(params, obs):
    x = jnp.transpose(obs.astype(jnp.float32), (0, 3, 1, 2))      # NCHW

    def conv(x, w, bias, s):
        y = jax.lax.conv_general_dilated(
            x, w, (s, s), "VALID", dimension_numbers=("NCHW", "OIHW", "NCHW"))
        return jax.nn.relu(y + bias.reshape(1, -1, 1, 1))

    x = conv(x, params["w1"], params["b1"], 3)
    x = conv(x, params["w2"], params["b2"], 2)
    x = conv(x, params["w3"], params["b3"], 2)
    feat = x.reshape(x.shape[0], -1)                              # NCHW flatten
    ha = jax.nn.relu(feat @ params["wa1"] + params["ba1"])
    logp = jax.nn.log_softmax(ha @ params["wa2"] + params["ba2"], axis=1)
    hc = jax.nn.relu(feat @ params["wc1"] + params["bc1"])
    val = (hc @ params["wc2"] + params["bc2"])[:, 0]
    return logp, val


if __name__ == "__main__":
    key = jax.random.PRNGKey(0)
    pkey, okey = jax.random.split(key)
    params = build_kernel_params(init_params(pkey))

    # batch=2, fixed 48x48 RGB observations (architecture requires 48)
    obs = jax.random.uniform(okey, (2, 48, 48, 3), jnp.float32, 0.0, 255.0)

    logp, value = image_ac_forward(params, obs)
    jax.block_until_ready((logp, value))

    ref_logp, ref_value = reference_forward(params, obs)
    assert logp.shape == (2, N_ACTIONS) and value.shape == (2,)

    # bf16 single-pass matmul operands with 0..255-scale inputs => slightly looser
    # tolerance than the f32/multi-pass path, per the performance review.
    assert jnp.allclose(logp, ref_logp, rtol=5e-2, atol=1e-1), (logp, ref_logp)
    assert jnp.allclose(value, ref_value, rtol=5e-2, atol=1e-1), (value, ref_value)
    # log-softmax self-consistency (independent of matmul precision).
    assert jnp.allclose(jnp.sum(jnp.exp(logp), axis=1), 1.0, atol=1e-3)
    # Policy-ordering check (only where the reference's top-2 gap is meaningful).
    srt = jnp.sort(ref_logp, axis=1)
    gap = srt[:, -1] - srt[:, -2]
    same = jnp.argmax(logp, axis=1) == jnp.argmax(ref_logp, axis=1)
    assert bool(jnp.all(same | (gap < 0.1)))

    print("KERNEL_OK")
</pallas_src>

<mosaic_0001>
module attributes {stable_mosaic.version = 11 : i64} {
  func.func @_image_ac_fused_kernel(%arg0: memref<32x432xbf16, #tpu.memory_space<vmem>>, %arg1: memref<432x128xbf16, #tpu.memory_space<vmem>>, %arg2: memref<1x128xf32, #tpu.memory_space<vmem>>, %arg3: memref<4x128x128xbf16, #tpu.memory_space<vmem>>, %arg4: memref<1x128xf32, #tpu.memory_space<vmem>>, %arg5: memref<3x128x128xbf16, #tpu.memory_space<vmem>>, %arg6: memref<1x128xf32, #tpu.memory_space<vmem>>, %arg7: memref<3x128x384xbf16, #tpu.memory_space<vmem>>, %arg8: memref<1x384xf32, #tpu.memory_space<vmem>>, %arg9: memref<384x128xbf16, #tpu.memory_space<vmem>>, %arg10: memref<1x128xf32, #tpu.memory_space<vmem>>, %arg11: memref<2x128xf32, #tpu.memory_space<vmem>>, %arg12: memref<32x128xbf16, #tpu.memory_space<vmem>>, %arg13: memref<14x128xbf16, #tpu.memory_space<vmem>>, %arg14: memref<6x128xbf16, #tpu.memory_space<vmem>>) attributes {dimension_semantics = [], scalar_prefetch = 0 : i64, scratch_operands = 3 : i64, tpu.core_type = #tpu.core_type<tc>} {
    %c0 = arith.constant 0 : index
    %c0_0 = arith.constant 0 : index
    %0 = vector.load %arg0[%c0, %c0_0] : memref<32x432xbf16, #tpu.memory_space<vmem>>, vector<32x432xbf16>
    %c0_1 = arith.constant 0 : index
    %c0_2 = arith.constant 0 : index
    %1 = vector.load %arg1[%c0_1, %c0_2] : memref<432x128xbf16, #tpu.memory_space<vmem>>, vector<432x128xbf16>
    %cst = arith.constant dense<0.000000e+00> : vector<32x128xf32>
    %2 = tpu.matmul %0, %1, %cst {dimension_numbers = #tpu.dot_dimension_numbers<[1], [0], [0], [1], [0, 0, 1, 1], [], []>} : vector<32x432xbf16>, vector<432x128xbf16>, vector<32x128xf32> -> vector<32x128xf32>
    %c0_3 = arith.constant 0 : index
    %c0_4 = arith.constant 0 : index
    %3 = vector.load %arg2[%c0_3, %c0_4] : memref<1x128xf32, #tpu.memory_space<vmem>>, vector<1x128xf32>
    %4 = vector.broadcast %3 : vector<1x128xf32> to vector<32x128xf32>
    %5 = arith.addf %2, %4 : vector<32x128xf32>
    %cst_5 = arith.constant 0.000000e+00 : f32
    %6 = vector.broadcast %cst_5 : f32 to vector<32x128xf32>
    %7 = arith.maximumf %5, %6 : vector<32x128xf32>
    %8 = arith.truncf %7 : vector<32x128xf32> to vector<32x128xbf16>
    %c0_6 = arith.constant 0 : index
    %c0_7 = arith.constant 0 : index
    %9 = vector.load %arg12[%c0_6, %c0_7] : memref<32x128xbf16, #tpu.memory_space<vmem>>, vector<32x128xbf16>
    tpu.vector_store %arg12[%c0_6, %c0_7], %8 {strides = array<i32>} : memref<32x128xbf16, #tpu.memory_space<vmem>>, vector<32x128xbf16>,
    %c0_8 = arith.constant 0 : index
    %c0_9 = arith.constant 0 : index
    %10 = vector.load %arg12[%c0_8, %c0_9] : memref<32x128xbf16, #tpu.memory_space<vmem>>, vector<8x128xbf16>
    %c0_10 = arith.constant 0 : index
    %c0_11 = arith.constant 0 : index
    %c0_12 = arith.constant 0 : index
    %11 = vector.load %arg3[%c0_10, %c0_11, %c0_12] : memref<4x128x128xbf16, #tpu.memory_space<vmem>>, vector<1x128x128xbf16>
    %12 = vector.shape_cast %11 : vector<1x128x128xbf16> to vector<128x128xbf16>
    %cst_13 = arith.constant dense<0.000000e+00> : vector<8x128xf32>
    %13 = tpu.matmul %10, %12, %cst_13 {dimension_numbers = #tpu.dot_dimension_numbers<[1], [0], [0], [1], [0, 0, 1, 1], [], []>} : vector<8x128xbf16>, vector<128x128xbf16>, vector<8x128xf32> -> vector<8x128xf32>
    %c8 = arith.constant 8 : index
    %c0_14 = arith.constant 0 : index
    %14 = vector.load %arg12[%c8, %c0_14] : memref<32x128xbf16, #tpu.memory_space<vmem>>, vector<8x128xbf16>
    %c1 = arith.constant 1 : index
    %c0_15 = arith.constant 0 : index
    %c0_16 = arith.constant 0 : index
    %15 = vector.load %arg3[%c1, %c0_15, %c0_16] : memref<4x128x128xbf16, #tpu.memory_space<vmem>>, vector<1x128x128xbf16>
    %16 = vector.shape_cast %15 : vector<1x128x128xbf16> to vector<128x128xbf16>
    %cst_17 = arith.constant dense<0.000000e+00> : vector<8x128xf32>
    %17 = tpu.matmul %14, %16, %cst_17 {dimension_numbers = #tpu.dot_dimension_numbers<[1], [0], [0], [1], [0, 0, 1, 1], [], []>} : vector<8x128xbf16>, vector<128x128xbf16>, vector<8x128xf32> -> vector<8x128xf32>
    %18 = arith.addf %13, %17 : vector<8x128xf32>
    %c16 = arith.constant 16 : index
    %c0_18 = arith.constant 0 : index
    %19 = vector.load %arg12[%c16, %c0_18] : memref<32x128xbf16, #tpu.memory_space<vmem>>, vector<8x128xbf16>
    %c2 = arith.constant 2 : index
    %c0_19 = arith.constant 0 : index
    %c0_20 = arith.constant 0 : index
    %20 = vector.load %arg3[%c2, %c0_19, %c0_20] : memref<4x128x128xbf16, #tpu.memory_space<vmem>>, vector<1x128x128xbf16>
    %21 = vector.shape_cast %20 : vector<1x128x128xbf16> to vector<128x128xbf16>
    %cst_21 = arith.constant dense<0.000000e+00> : vector<8x128xf32>
    %22 = tpu.matmul %19, %21, %cst_21 {dimension_numbers = #tpu.dot_dimension_numbers<[1], [0], [0], [1], [0, 0, 1, 1], [], []>} : vector<8x128xbf16>, vector<128x128xbf16>, vector<8x128xf32> -> vector<8x128xf32>
    %23 = arith.addf %18, %22 : vector<8x128xf32>
    %c24 = arith.constant 24 : index
    %c0_22 = arith.constant 0 : index
    %24 = vector.load %arg12[%c24, %c0_22] : memref<32x128xbf16, #tpu.memory_space<vmem>>, vector<8x128xbf16>
    %c3 = arith.constant 3 : index
    %c0_23 = arith.constant 0 : index
    %c0_24 = arith.constant 0 : index
    %25 = vector.load %arg3[%c3, %c0_23, %c0_24] : memref<4x128x128xbf16, #tpu.memory_space<vmem>>, vector<1x128x128xbf16>
    %26 = vector.shape_cast %25 : vector<1x128x128xbf16> to vector<128x128xbf16>
    %cst_25 = arith.constant dense<0.000000e+00> : vector<8x128xf32>
    %27 = tpu.matmul %24, %26, %cst_25 {dimension_numbers = #tpu.dot_dimension_numbers<[1], [0], [0], [1], [0, 0, 1, 1], [], []>} : vector<8x128xbf16>, vector<128x128xbf16>, vector<8x128xf32> -> vector<8x128xf32>
    %28 = arith.addf %23, %27 : vector<8x128xf32>
    %c0_26 = arith.constant 0 : index
    %c0_27 = arith.constant 0 : index
    %29 = vector.load %arg4[%c0_26, %c0_27] : memref<1x128xf32, #tpu.memory_space<vmem>>, vector<1x128xf32>
    %30 = vector.broadcast %29 : vector<1x128xf32> to vector<8x128xf32>
    %31 = arith.addf %28, %30 : vector<8x128xf32>
    %cst_28 = arith.constant 0.000000e+00 : f32
    %32 = vector.broadcast %cst_28 : f32 to vector<8x128xf32>
    %33 = arith.maximumf %31, %32 : vector<8x128xf32>
    %34 = arith.truncf %33 : vector<8x128xf32> to vector<8x128xbf16>
    %c0_29 = arith.constant 0 : index
    %c0_30 = arith.constant 0 : index
    %35 = vector.load %arg13[%c0_29, %c0_30] : memref<14x128xbf16, #tpu.memory_space<vmem>>, vector<8x128xbf16>
    tpu.vector_store %arg13[%c0_29, %c0_30], %34 {strides = array<i32>} : memref<14x128xbf16, #tpu.memory_space<vmem>>, vector<8x128xbf16>,
    %c16_31 = arith.constant 16 : index
    %c0_32 = arith.constant 0 : index
    %36 = vector.load %arg12[%c16_31, %c0_32] : memref<32x128xbf16, #tpu.memory_space<vmem>>, vector<6x128xbf16>
    %c0_33 = arith.constant 0 : index
    %c0_34 = arith.constant 0 : index
    %c0_35 = arith.constant 0 : index
    %37 = vector.load %arg3[%c0_33, %c0_34, %c0_35] : memref<4x128x128xbf16, #tpu.memory_space<vmem>>, vector<1x128x128xbf16>
    %38 = vector.shape_cast %37 : vector<1x128x128xbf16> to vector<128x128xbf16>
    %cst_36 = arith.constant dense<0.000000e+00> : vector<6x128xf32>
    %39 = tpu.matmul %36, %38, %cst_36 {dimension_numbers = #tpu.dot_dimension_numbers<[1], [0], [0], [1], [0, 0, 1, 1], [], []>} : vector<6x128xbf16>, vector<128x128xbf16>, vector<6x128xf32> -> vector<6x128xf32>
    %c24_37 = arith.constant 24 : index
    %c0_38 = arith.constant 0 : index
    %40 = vector.load %arg12[%c24_37, %c0_38] : memref<32x128xbf16, #tpu.memory_space<vmem>>, vector<6x128xbf16>
    %c1_39 = arith.constant 1 : index
    %c0_40 = arith.constant 0 : index
    %c0_41 = arith.constant 0 : index
    %41 = vector.load %arg3[%c1_39, %c0_40, %c0_41] : memref<4x128x128xbf16, #tpu.memory_space<vmem>>, vector<1x128x128xbf16>
    %42 = vector.shape_cast %41 : vector<1x128x128xbf16> to vector<128x128xbf16>
    %cst_42 = arith.constant dense<0.000000e+00> : vector<6x128xf32>
    %43 = tpu.matmul %40, %42, %cst_42 {dimension_numbers = #tpu.dot_dimension_numbers<[1], [0], [0], [1], [0, 0, 1, 1], [], []>} : vector<6x128xbf16>, vector<128x128xbf16>, vector<6x128xf32> -> vector<6x128xf32>
    %44 = arith.addf %39, %43 : vector<6x128xf32>
    %c2_43 = arith.constant 2 : index
    %c0_44 = arith.constant 0 : index
    %45 = vector.load %arg12[%c2_43, %c0_44] : memref<32x128xbf16, #tpu.memory_space<vmem>>, vector<6x128xbf16>
    %c2_45 = arith.constant 2 : index
    %c0_46 = arith.constant 0 : index
    %c0_47 = arith.constant 0 : index
    %46 = vector.load %arg3[%c2_45, %c0_46, %c0_47] : memref<4x128x128xbf16, #tpu.memory_space<vmem>>, vector<1x128x128xbf16>
    %47 = vector.shape_cast %46 : vector<1x128x128xbf16> to vector<128x128xbf16>
    %cst_48 = arith.constant dense<0.000000e+00> : vector<6x128xf32>
    %48 = tpu.matmul %45, %47, %cst_48 {dimension_numbers = #tpu.dot_dimension_numbers<[1], [0], [0], [1], [0, 0, 1, 1], [], []>} : vector<6x128xbf16>, vector<128x128xbf16>, vector<6x128xf32> -> vector<6x128xf32>
    %49 = arith.addf %44, %48 : vector<6x128xf32>
    %c10 = arith.constant 10 : index
    %c0_49 = arith.constant 0 : index
    %50 = vector.load %arg12[%c10, %c0_49] : memref<32x128xbf16, #tpu.memory_space<vmem>>, vector<6x128xbf16>
    %c3_50 = arith.constant 3 : index
    %c0_51 = arith.constant 0 : index
    %c0_52 = arith.constant 0 : index
    %51 = vector.load %arg3[%c3_50, %c0_51, %c0_52] : memref<4x128x128xbf16, #tpu.memory_space<vmem>>, vector<1x128x128xbf16>
    %52 = vector.shape_cast %51 : vector<1x128x128xbf16> to vector<128x128xbf16>
    %cst_53 = arith.constant dense<0.000000e+00> : vector<6x128xf32>
    %53 = tpu.matmul %50, %52, %cst_53 {dimension_numbers = #tpu.dot_dimension_numbers<[1], [0], [0], [1], [0, 0, 1, 1], [], []>} : vector<6x128xbf16>, vector<128x128xbf16>, vector<6x128xf32> -> vector<6x128xf32>
    %54 = arith.addf %49, %53 : vector<6x128xf32>
    %c0_54 = arith.constant 0 : index
    %c0_55 = arith.constant 0 : index
    %55 = vector.load %arg4[%c0_54, %c0_55] : memref<1x128xf32, #tpu.memory_space<vmem>>, vector<1x128xf32>
    %56 = vector.broadcast %55 : vector<1x128xf32> to vector<6x128xf32>
    %57 = arith.addf %54, %56 : vector<6x128xf32>
    %cst_56 = arith.constant 0.000000e+00 : f32
    %58 = vector.broadcast %cst_56 : f32 to vector<6x128xf32>
    %59 = arith.maximumf %57, %58 : vector<6x128xf32>
    %60 = arith.truncf %59 : vector<6x128xf32> to vector<6x128xbf16>
    %c8_57 = arith.constant 8 : index
    %c0_58 = arith.constant 0 : index
    %61 = vector.load %arg13[%c8_57, %c0_58] : memref<14x128xbf16, #tpu.memory_space<vmem>>, vector<6x128xbf16>
    tpu.vector_store %arg13[%c8_57, %c0_58], %60 {strides = array<i32>} : memref<14x128xbf16, #tpu.memory_space<vmem>>, vector<6x128xbf16>,
    %c0_59 = arith.constant 0 : index
    %c0_60 = arith.constant 0 : index
    %62 = vector.load %arg13[%c0_59, %c0_60] : memref<14x128xbf16, #tpu.memory_space<vmem>>, vector<6x128xbf16>
    %c0_61 = arith.constant 0 : index
    %c0_62 = arith.constant 0 : index
    %c0_63 = arith.constant 0 : index
    %63 = vector.load %arg5[%c0_61, %c0_62, %c0_63] : memref<3x128x128xbf16, #tpu.memory_space<vmem>>, vector<1x128x128xbf16>
    %64 = vector.shape_cast %63 : vector<1x128x128xbf16> to vector<128x128xbf16>
    %cst_64 = arith.constant dense<0.000000e+00> : vector<6x128xf32>
    %65 = tpu.matmul %62, %64, %cst_64 {dimension_numbers = #tpu.dot_dimension_numbers<[1], [0], [0], [1], [0, 0, 1, 1], [], []>} : vector<6x128xbf16>, vector<128x128xbf16>, vector<6x128xf32> -> vector<6x128xf32>
    %c8_65 = arith.constant 8 : index
    %c0_66 = arith.constant 0 : index
    %66 = vector.load %arg13[%c8_65, %c0_66] : memref<14x128xbf16, #tpu.memory_space<vmem>>, vector<6x128xbf16>
    %c1_67 = arith.constant 1 : index
    %c0_68 = arith.constant 0 : index
    %c0_69 = arith.constant 0 : index
    %67 = vector.load %arg5[%c1_67, %c0_68, %c0_69] : memref<3x128x128xbf16, #tpu.memory_space<vmem>>, vector<1x128x128xbf16>
    %68 = vector.shape_cast %67 : vector<1x128x128xbf16> to vector<128x128xbf16>
    %cst_70 = arith.constant dense<0.000000e+00> : vector<6x128xf32>
    %69 = tpu.matmul %66, %68, %cst_70 {dimension_numbers = #tpu.dot_dimension_numbers<[1], [0], [0], [1], [0, 0, 1, 1], [], []>} : vector<6x128xbf16>, vector<128x128xbf16>, vector<6x128xf32> -> vector<6x128xf32>
    %70 = arith.addf %65, %69 : vector<6x128xf32>
    %c2_71 = arith.constant 2 : index
    %c0_72 = arith.constant 0 : index
    %71 = vector.load %arg13[%c2_71, %c0_72] : memref<14x128xbf16, #tpu.memory_space<vmem>>, vector<6x128xbf16>
    %c2_73 = arith.constant 2 : index
    %c0_74 = arith.constant 0 : index
    %c0_75 = arith.constant 0 : index
    %72 = vector.load %arg5[%c2_73, %c0_74, %c0_75] : memref<3x128x128xbf16, #tpu.memory_space<vmem>>, vector<1x128x128xbf16>
    %73 = vector.shape_cast %72 : vector<1x128x128xbf16> to vector<128x128xbf16>
    %cst_76 = arith.constant dense<0.000000e+00> : vector<6x128xf32>
    %74 = tpu.matmul %71, %73, %cst_76 {dimension_numbers = #tpu.dot_dimension_numbers<[1], [0], [0], [1], [0, 0, 1, 1], [], []>} : vector<6x128xbf16>, vector<128x128xbf16>, vector<6x128xf32> -> vector<6x128xf32>
    %75 = arith.addf %70, %74 : vector<6x128xf32>
    %c0_77 = arith.constant 0 : index
    %c0_78 = arith.constant 0 : index
    %76 = vector.load %arg6[%c0_77, %c0_78] : memref<1x128xf32, #tpu.memory_space<vmem>>, vector<1x128xf32>
    %77 = vector.broadcast %76 : vector<1x128xf32> to vector<6x128xf32>
    %78 = arith.addf %75, %77 : vector<6x128xf32>
    %cst_79 = arith.constant 0.000000e+00 : f32
    %79 = vector.broadcast %cst_79 : f32 to vector<6x128xf32>
    %80 = arith.maximumf %78, %79 : vector<6x128xf32>
    %81 = arith.truncf %80 : vector<6x128xf32> to vector<6x128xbf16>
    %c0_80 = arith.constant 0 : index
    %c0_81 = arith.constant 0 : index
    %82 = vector.load %arg14[%c0_80, %c0_81] : memref<6x128xbf16, #tpu.memory_space<vmem>>, vector<6x128xbf16>
    tpu.vector_store %arg14[%c0_80, %c0_81], %81 {strides = array<i32>} : memref<6x128xbf16, #tpu.memory_space<vmem>>, vector<6x128xbf16>,
    %c0_82 = arith.constant 0 : index
    %c0_83 = arith.constant 0 : index
    %83 = vector.load %arg14[%c0_82, %c0_83] : memref<6x128xbf16, #tpu.memory_space<vmem>>, vector<2x128xbf16>
    %c0_84 = arith.constant 0 : index
    %c0_85 = arith.constant 0 : index
    %c0_86 = arith.constant 0 : index
    %84 = vector.load %arg7[%c0_84, %c0_85, %c0_86] : memref<3x128x384xbf16, #tpu.memory_space<vmem>>, vector<1x128x384xbf16>
    %85 = vector.shape_cast %84 : vector<1x128x384xbf16> to vector<128x384xbf16>
    %cst_87 = arith.constant dense<0.000000e+00> : vector<2x384xf32>
    %86 = tpu.matmul %83, %85, %cst_87 {dimension_numbers = #tpu.dot_dimension_numbers<[1], [0], [0], [1], [0, 0, 1, 1], [], []>} : vector<2x128xbf16>, vector<128x384xbf16>, vector<2x384xf32> -> vector<2x384xf32>
    %c2_88 = arith.constant 2 : index
    %c0_89 = arith.constant 0 : index
    %87 = vector.load %arg14[%c2_88, %c0_89] : memref<6x128xbf16, #tpu.memory_space<vmem>>, vector<2x128xbf16>
    %c1_90 = arith.constant 1 : index
    %c0_91 = arith.constant 0 : index
    %c0_92 = arith.constant 0 : index
    %88 = vector.load %arg7[%c1_90, %c0_91, %c0_92] : memref<3x128x384xbf16, #tpu.memory_space<vmem>>, vector<1x128x384xbf16>
    %89 = vector.shape_cast %88 : vector<1x128x384xbf16> to vector<128x384xbf16>
    %cst_93 = arith.constant dense<0.000000e+00> : vector<2x384xf32>
    %90 = tpu.matmul %87, %89, %cst_93 {dimension_numbers = #tpu.dot_dimension_numbers<[1], [0], [0], [1], [0, 0, 1, 1], [], []>} : vector<2x128xbf16>, vector<128x384xbf16>, vector<2x384xf32> -> vector<2x384xf32>
    %91 = arith.addf %86, %90 : vector<2x384xf32>
    %c4 = arith.constant 4 : index
    %c0_94 = arith.constant 0 : index
    %92 = vector.load %arg14[%c4, %c0_94] : memref<6x128xbf16, #tpu.memory_space<vmem>>, vector<2x128xbf16>
    %c2_95 = arith.constant 2 : index
    %c0_96 = arith.constant 0 : index
    %c0_97 = arith.constant 0 : index
    %93 = vector.load %arg7[%c2_95, %c0_96, %c0_97] : memref<3x128x384xbf16, #tpu.memory_space<vmem>>, vector<1x128x384xbf16>
    %94 = vector.shape_cast %93 : vector<1x128x384xbf16> to vector<128x384xbf16>
    %cst_98 = arith.constant dense<0.000000e+00> : vector<2x384xf32>
    %95 = tpu.matmul %92, %94, %cst_98 {dimension_numbers = #tpu.dot_dimension_numbers<[1], [0], [0], [1], [0, 0, 1, 1], [], []>} : vector<2x128xbf16>, vector<128x384xbf16>, vector<2x384xf32> -> vector<2x384xf32>
    %96 = arith.addf %91, %95 : vector<2x384xf32>
    %c0_99 = arith.constant 0 : index
    %c0_100 = arith.constant 0 : index
    %97 = vector.load %arg8[%c0_99, %c0_100] : memref<1x384xf32, #tpu.memory_space<vmem>>, vector<1x384xf32>
    %98 = vector.broadcast %97 : vector<1x384xf32> to vector<2x384xf32>
    %99 = arith.addf %96, %98 : vector<2x384xf32>
    %cst_101 = arith.constant 0.000000e+00 : f32
    %100 = vector.broadcast %cst_101 : f32 to vector<2x384xf32>
    %101 = arith.maximumf %99, %100 : vector<2x384xf32>
    %102 = arith.truncf %101 : vector<2x384xf32> to vector<2x384xbf16>
    %c0_102 = arith.constant 0 : index
    %c0_103 = arith.constant 0 : index
    %103 = vector.load %arg9[%c0_102, %c0_103] : memref<384x128xbf16, #tpu.memory_space<vmem>>, vector<384x128xbf16>
    %cst_104 = arith.constant dense<0.000000e+00> : vector<2x128xf32>
    %104 = tpu.matmul %102, %103, %cst_104 {dimension_numbers = #tpu.dot_dimension_numbers<[1], [0], [0], [1], [0, 0, 1, 1], [], []>} : vector<2x384xbf16>, vector<384x128xbf16>, vector<2x128xf32> -> vector<2x128xf32>
    %c0_105 = arith.constant 0 : index
    %c0_106 = arith.constant 0 : index
    %105 = vector.load %arg10[%c0_105, %c0_106] : memref<1x128xf32, #tpu.memory_space<vmem>>, vector<1x128xf32>
    %106 = vector.broadcast %105 : vector<1x128xf32> to vector<2x128xf32>
    %107 = arith.addf %104, %106 : vector<2x128xf32>
    %108 = tpu.iota {dimensions = array<i32: 1>} : vector<2x128xi32>
    %c3_i32 = arith.constant 3 : i32
    %109 = vector.broadcast %c3_i32 : i32 to vector<2x128xi32>
    %110 = arith.cmpi slt, %108, %109 : vector<2x128xi32>
    %cst_107 = arith.constant -1.000000e+30 : f32
    %111 = vector.broadcast %cst_107 : f32 to vector<2x128xf32>
    %112 = arith.select %110, %107, %111 : vector<2x128xi1>, vector<2x128xf32>
    %cst_108 = arith.constant dense<0xFF800000> : vector<2xf32>
    %113 = vector.multi_reduction <maximumf>, %112, %cst_108 [1] : vector<2x128xf32> to vector<2xf32>
    %114 = vector.shape_cast %113 : vector<2xf32> to vector<2x1xf32>
    %115 = vector.broadcast %114 : vector<2x1xf32> to vector<2x128xf32>
    %116 = arith.subf %112, %115 : vector<2x128xf32>
    %117 = math.exp %116 : vector<2x128xf32>
    %cst_109 = arith.constant dense<0.000000e+00> : vector<2xf32>
    %118 = vector.multi_reduction <add>, %117, %cst_109 [1] : vector<2x128xf32> to vector<2xf32>
    %119 = vector.shape_cast %118 : vector<2xf32> to vector<2x1xf32>
    %120 = math.log %119 : vector<2x1xf32>
    %121 = arith.addf %114, %120 : vector<2x1xf32>
    %122 = vector.broadcast %121 : vector<2x1xf32> to vector<2x128xf32>
    %123 = arith.subf %107, %122 : vector<2x128xf32>
    %124 = arith.select %110, %123, %107 : vector<2x128xi1>, vector<2x128xf32>
    %c0_110 = arith.constant 0 : index
    %c0_111 = arith.constant 0 : index
    %125 = vector.load %arg11[%c0_110, %c0_111] : memref<2x128xf32, #tpu.memory_space<vmem>>, vector<2x128xf32>
    tpu.vector_store %arg11[%c0_110, %c0_111], %124 {strides = array<i32>} : memref<2x128xf32, #tpu.memory_space<vmem>>, vector<2x128xf32>,
    return
  }
}

</mosaic_0001>

<llo_original>
// kernel: image_ac_forward.1
$region0: #{image_ac_forward.1}
  #allocation0 [shape = 'u32[]', space=smem, size = 0x4, offset = 0x4, fixed_abs, tag = 'smem constant byte address 0x4 - core index']
  #allocation1 [shape = 'u32[144,128]{1,0:T(1,128)}', space=vmem, size = 0x12000, scoped, tag = 'internal scratch']
  #allocation2 [shape = 'bf16[32,128]{1,0:T(16,128)(2,1)}', space=vmem, size = 0x2000, scoped, tag = 'scratch operand']
  #allocation3 [shape = 'bf16[14,128]{1,0:T(8,128)(2,1)}', space=vmem, size = 0x1000, scoped, tag = 'scratch operand']
  #allocation4 [shape = 'bf16[6,128]{1,0:T(8,128)(2,1)}', space=vmem, size = 0x800, scoped, tag = 'scratch operand']
  %s0 = inlined_call_operand.vmem [shape: bf16[32,432], index: 0, kind: input, shape index: {}]
  %s1 = inlined_call_operand.vmem [shape: bf16[432,128], index: 1, kind: input, shape index: {}]
  %s2 = inlined_call_operand.vmem [shape: f32[1,128], index: 2, kind: input, shape index: {}]
  %s3 = inlined_call_operand.vmem [shape: bf16[4,128,128], index: 3, kind: input, shape index: {}]
  %s4 = inlined_call_operand.vmem [shape: f32[1,128], index: 4, kind: input, shape index: {}]
  %s5 = inlined_call_operand.vmem [shape: bf16[3,128,128], index: 5, kind: input, shape index: {}]
  %s6 = inlined_call_operand.vmem [shape: f32[1,128], index: 6, kind: input, shape index: {}]
  %s7 = inlined_call_operand.vmem [shape: bf16[3,128,384], index: 7, kind: input, shape index: {}]
  %s8 = inlined_call_operand.vmem [shape: f32[1,384], index: 8, kind: input, shape index: {}]
  %s9 = inlined_call_operand.vmem [shape: bf16[384,128], index: 9, kind: input, shape index: {}]
  %s10 = inlined_call_operand.vmem [shape: f32[1,128], index: 10, kind: input, shape index: {}]
  %s11 = inlined_call_operand.vmem [shape: f32[2,128], index: 11, kind: output, shape index: {}]
  %s12 = sld [smem:[#allocation0]]
  $region54: #{image_ac_forward.1} parent=0
    _
  %s14 = ssub.s32 1, %s12
  %s15 = scalar_select 0, %s14, %s12
  // Predicated region
  $region2: #{image_ac_forward.1} parent=0 // pred_check
    _
  $region3: #{image_ac_forward.1} parent=0 // pred_check_branch
    %17 = sbr.rel (0) target = $region5
  $region4: #{image_ac_forward.1} parent=0 // pred_region
    _
  $region5: #{image_ac_forward.1} parent=0 // pred_fallthru
    _
  // Predicated region
  $region6: #{image_ac_forward.1} parent=0 // pred_check
    _
  $region7: #{image_ac_forward.1} parent=0 // pred_check_branch
    %19 = sbr.rel (0) target = $region9
  $region8: #{image_ac_forward.1} parent=0 // pred_region
    _
  $region9: #{image_ac_forward.1} parent=0 // pred_fallthru
    _
  // Predicated region
  $region10: #{image_ac_forward.1} parent=0 // pred_check
    _
  $region11: #{image_ac_forward.1} parent=0 // pred_check_branch
    %21 = sbr.rel (0) target = $region13
  $region12: #{image_ac_forward.1} parent=0 // pred_region
    _
  $region13: #{image_ac_forward.1} parent=0 // pred_fallthru
    _
  // Predicated region
  $region14: #{image_ac_forward.1} parent=0 // pred_check
    _
  $region15: #{image_ac_forward.1} parent=0 // pred_check_branch
    %23 = sbr.rel (0) target = $region17
  $region16: #{image_ac_forward.1} parent=0 // pred_region
    _
  $region17: #{image_ac_forward.1} parent=0 // pred_fallthru
    _
  // Predicated region
  $region18: #{image_ac_forward.1} parent=0 // pred_check
    _
  $region19: #{image_ac_forward.1} parent=0 // pred_check_branch
    %25 = sbr.rel (0) target = $region21
  $region20: #{image_ac_forward.1} parent=0 // pred_region
    _
  $region21: #{image_ac_forward.1} parent=0 // pred_fallthru
    _
  // Predicated region
  $region22: #{image_ac_forward.1} parent=0 // pred_check
    _
  $region23: #{image_ac_forward.1} parent=0 // pred_check_branch
    %27 = sbr.rel (0) target = $region25
  $region24: #{image_ac_forward.1} parent=0 // pred_region
    _
  $region25: #{image_ac_forward.1} parent=0 // pred_fallthru
    _
  // Predicated region
  $region26: #{image_ac_forward.1} parent=0 // pred_check
    _
  $region27: #{image_ac_forward.1} parent=0 // pred_check_branch
    %29 = sbr.rel (0) target = $region29
  $region28: #{image_ac_forward.1} parent=0 // pred_region
    _
  $region29: #{image_ac_forward.1} parent=0 // pred_fallthru
    _
  // Predicated region
  $region30: #{image_ac_forward.1} parent=0 // pred_check
    _
  $region31: #{image_ac_forward.1} parent=0 // pred_check_branch
    %31 = sbr.rel (0) target = $region33
  $region32: #{image_ac_forward.1} parent=0 // pred_region
    _
  $region33: #{image_ac_forward.1} parent=0 // pred_fallthru
    _
  // Predicated region
  $region34: #{image_ac_forward.1} parent=0 // pred_check
    _
  $region35: #{image_ac_forward.1} parent=0 // pred_check_branch
    %33 = sbr.rel (0) target = $region37
  $region36: #{image_ac_forward.1} parent=0 // pred_region
    _
  $region37: #{image_ac_forward.1} parent=0 // pred_fallthru
    _
  // Predicated region
  $region38: #{image_ac_forward.1} parent=0 // pred_check
    _
  $region39: #{image_ac_forward.1} parent=0 // pred_check_branch
    %35 = sbr.rel (0) target = $region41
  $region40: #{image_ac_forward.1} parent=0 // pred_region
    _
  $region41: #{image_ac_forward.1} parent=0 // pred_fallthru
    _
  // Predicated region
  $region42: #{image_ac_forward.1} parent=0 // pred_check
    _
  $region43: #{image_ac_forward.1} parent=0 // pred_check_branch
    %37 = sbr.rel (0) target = $region45
  $region44: #{image_ac_forward.1} parent=0 // pred_region
    _
  $region45: #{image_ac_forward.1} parent=0 // pred_fallthru
    _
  %v39 = vld [vmem:[%s0] sm:$0xff]
  %v40 = vld [vmem:[%s0 + $0x8] sm:$0xff]
  %v41 = vld [vmem:[%s0 + $0x10] sm:$0xff]
  %v42 = vld [vmem:[%s0 + $0x18] sm:$0xff]
  %v43 = vld [vmem:[%s0 + $0x20] sm:$0xff]
  %v44 = vld [vmem:[%s0 + $0x28] sm:$0xff]
  %v45 = vld [vmem:[%s0 + $0x30] sm:$0xff]
  %v46 = vld [vmem:[%s0 + $0x38] sm:$0xff]
  %v47 = vld [vmem:[%s1] sm:$0xf]
  %v48 = vld [vmem:[%s1 + $0x4] sm:$0xf]
  %v49 = vld [vmem:[%s1 + $0x8] sm:$0xf]
  %v50 = vld [vmem:[%s1 + $0xc] sm:$0xf]
  %v51 = vld [vmem:[%s1 + $0x10] sm:$0xf]
  %v52 = vld [vmem:[%s1 + $0x14] sm:$0xf]
  %v53 = vld [vmem:[%s1 + $0x18] sm:$0xf]
  %v54 = vld [vmem:[%s1 + $0x1c] sm:$0xf]
  %v55 = vld [vmem:[%s1 + $0x20] sm:$0xf]
  %v56 = vld [vmem:[%s1 + $0x24] sm:$0xf]
  %v57 = vld [vmem:[%s1 + $0x28] sm:$0xf]
  %v58 = vld [vmem:[%s1 + $0x2c] sm:$0xf]
  %v59 = vld [vmem:[%s1 + $0x30] sm:$0xf]
  %v60 = vld [vmem:[%s1 + $0x34] sm:$0xf]
  %v61 = vld [vmem:[%s1 + $0x38] sm:$0xf]
  %v62 = vld [vmem:[%s1 + $0x3c] sm:$0xf]
  %v63 = vld [vmem:[%s1 + $0x40] sm:$0xf]
  %v64 = vld [vmem:[%s1 + $0x44] sm:$0xf]
  %v65 = vld [vmem:[%s1 + $0x48] sm:$0xf]
  %v66 = vld [vmem:[%s1 + $0x4c] sm:$0xf]
  %v67 = vld [vmem:[%s1 + $0x50] sm:$0xf]
  %v68 = vld [vmem:[%s1 + $0x54] sm:$0xf]
  %v69 = vld [vmem:[%s1 + $0x58] sm:$0xf]
  %v70 = vld [vmem:[%s1 + $0x5c] sm:$0xf]
  %v71 = vld [vmem:[%s1 + $0x60] sm:$0xf]
  %v72 = vld [vmem:[%s1 + $0x64] sm:$0xf]
  %v73 = vld [vmem:[%s1 + $0x68] sm:$0xf]
  %v74 = vld [vmem:[%s1 + $0x6c] sm:$0xf]
  %v75 = vld [vmem:[%s1 + $0x70] sm:$0xf]
  %v76 = vld [vmem:[%s1 + $0x74] sm:$0xf]
  %v77 = vld [vmem:[%s1 + $0x78] sm:$0xf]
  %v78 = vld [vmem:[%s1 + $0x7c] sm:$0xf]
  %v79 = vld [vmem:[%s1 + $0x80] sm:$0xf]
  %v80 = vld [vmem:[%s1 + $0x84] sm:$0xf]
  %v81 = vld [vmem:[%s1 + $0x88] sm:$0xf]
  %v82 = vld [vmem:[%s1 + $0x8c] sm:$0xf]
  %v83 = vld [vmem:[%s1 + $0x90] sm:$0xf]
  %v84 = vld [vmem:[%s1 + $0x94] sm:$0xf]
  %v85 = vld [vmem:[%s1 + $0x98] sm:$0xf]
  %v86 = vld [vmem:[%s1 + $0x9c] sm:$0xf]
  %v87 = vld [vmem:[%s1 + $0xa0] sm:$0xf]
  %v88 = vld [vmem:[%s1 + $0xa4] sm:$0xf]
  %v89 = vld [vmem:[%s1 + $0xa8] sm:$0xf]
  %v90 = vld [vmem:[%s1 + $0xac] sm:$0xf]
  %v91 = vld [vmem:[%s1 + $0xb0] sm:$0xf]
  %v92 = vld [vmem:[%s1 + $0xb4] sm:$0xf]
  %v93 = vld [vmem:[%s1 + $0xb8] sm:$0xf]
  %v94 = vld [vmem:[%s1 + $0xbc] sm:$0xf]
  %v95 = vld [vmem:[%s1 + $0xc0] sm:$0xf]
  %v96 = vld [vmem:[%s1 + $0xc4] sm:$0xf]
  %v97 = vld [vmem:[%s1 + $0xc8] sm:$0xf]
  %v98 = vld [vmem:[%s1 + $0xcc] sm:$0xf]
  %v99 = vld [vmem:[%s1 + $0xd0] sm:$0xf]
  %v100 = vld [vmem:[%s1 + $0xd4] sm:$0xf]
  %v101 = vld [vmem:[%s2] sm:$0x1]
  %v103 = vlaneseq
  %v104 = vshrl.u32 %v103, 7
  %v105 = vsub.s32 0, %v104
  %v106 = vrot.slane %v101, %v105
  %v116 = vunpack.c.l.b16 %v39
  %v117 = vunpack.c.h.b16 %v39
  %v118 = vunpack.c.l.b16 %v40
  %v119 = vunpack.c.h.b16 %v40
  %v120 = vunpack.c.l.b16 %v41
  %v121 = vunpack.c.h.b16 %v41
  %v122 = vunpack.c.l.b16 %v42
  %v123 = vunpack.c.h.b16 %v42
  %v124 = vunpack.c.l.b16 %v43
  %v125 = vunpack.c.h.b16 %v43
  %v126 = vunpack.c.l.b16 %v44
  %v127 = vunpack.c.h.b16 %v44
  %v128 = vunpack.c.l.b16 %v45
  %v129 = vunpack.c.h.b16 %v45
  %v130 = vunpack.c.l.b16 %v46
  %v131 = vunpack.c.h.b16 %v46
  %v132 = vpack.c.b16 %v120, %v116
  %v133 = vpack.c.b16 %v121, %v117
  %v134 = vpack.c.b16 %v122, %v118
  %v135 = vpack.c.b16 %v123, %v119
  %v136 = vpack.c.b16 %v128, %v124
  %v137 = vpack.c.b16 %v129, %v125
  %v138 = vpack.c.b16 %v130, %v126
  %v139 = vpack.c.b16 %v131, %v127
  %v200 = vunpack.c.l.b16 %v47
  %v201 = vunpack.c.l.b16 %v48
  %v202 = vunpack.c.l.b16 %v49
  %v203 = vunpack.c.l.b16 %v50
  %v204 = vunpack.c.l.b16 %v51
  %v205 = vunpack.c.l.b16 %v52
  %v206 = vunpack.c.l.b16 %v53
  %v207 = vunpack.c.l.b16 %v54
  %v208 = vunpack.c.l.b16 %v55
  %v209 = vunpack.c.l.b16 %v56
  %v210 = vunpack.c.l.b16 %v57
  %v211 = vunpack.c.l.b16 %v58
  %v212 = vunpack.c.l.b16 %v59
  %v213 = vunpack.c.l.b16 %v60
  %v214 = vunpack.c.l.b16 %v61
  %v215 = vunpack.c.l.b16 %v62
  %v216 = vunpack.c.l.b16 %v63
  %v217 = vunpack.c.l.b16 %v64
  %v218 = vunpack.c.l.b16 %v65
  %v219 = vunpack.c.l.b16 %v66
  %v220 = vunpack.c.l.b16 %v67
  %v221 = vunpack.c.l.b16 %v68
  %v222 = vunpack.c.l.b16 %v69
  %v223 = vunpack.c.l.b16 %v70
  %v224 = vunpack.c.l.b16 %v71
  %v225 = vunpack.c.l.b16 %v72
  %v226 = vunpack.c.l.b16 %v73
  %v227 = vunpack.c.l.b16 %v74
  %v228 = vunpack.c.l.b16 %v75
  %v229 = vunpack.c.l.b16 %v76
  %v230 = vunpack.c.l.b16 %v77
  %v231 = vunpack.c.l.b16 %v78
  %v232 = vunpack.c.l.b16 %v79
  %v233 = vunpack.c.l.b16 %v80
  %v234 = vunpack.c.l.b16 %v81
  %v235 = vunpack.c.l.b16 %v82
  %v236 = vunpack.c.l.b16 %v83
  %v237 = vunpack.c.l.b16 %v84
  %v238 = vunpack.c.l.b16 %v85
  %v239 = vunpack.c.l.b16 %v86
  %v240 = vunpack.c.l.b16 %v87
  %v241 = vunpack.c.l.b16 %v88
  %v242 = vunpack.c.l.b16 %v89
  %v243 = vunpack.c.l.b16 %v90
  %v244 = vunpack.c.l.b16 %v91
  %v245 = vunpack.c.l.b16 %v92
  %v246 = vunpack.c.l.b16 %v93
  %v247 = vunpack.c.l.b16 %v94
  %v248 = vunpack.c.l.b16 %v95
  %v249 = vunpack.c.l.b16 %v96
  %v250 = vunpack.c.l.b16 %v97
  %v251 = vunpack.c.l.b16 %v98
  %v252 = vunpack.c.l.b16 %v99
  %v253 = vunpack.c.l.b16 %v100
  %v254 = vpack.c.b16 %v201, %v200
  %v255 = vpack.c.b16 %v203, %v202
  %v256 = vpack.c.b16 %v205, %v204
  %v257 = vpack.c.b16 %v207, %v206
  %v258 = vpack.c.b16 %v209, %v208
  %v259 = vpack.c.b16 %v211, %v210
  %v260 = vpack.c.b16 %v213, %v212
  %v261 = vpack.c.b16 %v215, %v214
  %v262 = vpack.c.b16 %v217, %v216
  %v263 = vpack.c.b16 %v219, %v218
  %v264 = vpack.c.b16 %v221, %v220
  %v265 = vpack.c.b16 %v223, %v222
  %v266 = vpack.c.b16 %v225, %v224
  %v267 = vpack.c.b16 %v227, %v226
  %v268 = vpack.c.b16 %v229, %v228
  %v269 = vpack.c.b16 %v231, %v230
  %v270 = vpack.c.b16 %v233, %v232
  %v271 = vpack.c.b16 %v235, %v234
  %v272 = vpack.c.b16 %v237, %v236
  %v273 = vpack.c.b16 %v239, %v238
  %v274 = vpack.c.b16 %v241, %v240
  %v275 = vpack.c.b16 %v243, %v242
  %v276 = vpack.c.b16 %v245, %v244
  %v277 = vpack.c.b16 %v247, %v246
  %v278 = vpack.c.b16 %v249, %v248
  %v279 = vpack.c.b16 %v251, %v250
  %v280 = vpack.c.b16 %v253, %v252
  %vm308 = vcmask 392192
  %v310 = vsel %vm308, %v135, 0
  %v313 = vsel %vm308, %v139, 0
  %315 = vmatprep.subr.bf16.mxu0 0
  %316 = vmatpush1.bf16.msra.mxu0 %v254
  %317 = vmatprep.subr.bf16.mxu0 0
  %318 = vmatpush1.bf16.msra.mxu0 %v255
  %319 = vmatprep.subr.bf16.mxu0 0
  %320 = vmatpush1.bf16.msra.mxu0 %v256
  %321 = vmatprep.subr.bf16.mxu0 0
  %322 = vmatpush1.bf16.msra.mxu0 %v257
  %323 = vmatprep.subr.bf16.mxu0 0
  %324 = vmatpush1.bf16.msra.mxu0 %v258
  %325 = vmatprep.subr.bf16.mxu0 0
  %326 = vmatpush1.bf16.msra.mxu0 %v259
  %327 = vmatprep.subr.bf16.mxu0 0
  %328 = vmatpush1.bf16.msra.mxu0 %v260
  %329 = vmatprep.subr.bf16.mxu0 0
  %330 = vmatpush1.bf16.msra.mxu0 %v261
  %331 = vmatprep.subr.bf16.mxu0 0
  %332 = vmatpush1.bf16.msra.mxu0 %v262
  %333 = vmatprep.subr.bf16.mxu0 0
  %334 = vmatpush1.bf16.msra.mxu0 %v263
  %335 = vmatprep.subr.bf16.mxu0 0
  %336 = vmatpush1.bf16.msra.mxu0 %v264
  %337 = vmatprep.subr.bf16.mxu0 0
  %338 = vmatpush1.bf16.msra.mxu0 %v265
  %339 = vmatprep.subr.bf16.mxu0 0
  %340 = vmatpush1.bf16.msra.mxu0 %v266
  %341 = vmatprep.subr.bf16.mxu0 0
  %342 = vmatpush1.bf16.msra.mxu0 %v267
  %343 = vmatprep.subr.bf16.mxu0 0
  %344 = vmatpush1.bf16.msra.mxu0 %v268
  %345 = vmatprep.subr.bf16.mxu0 0
  %346 = vmatpush1.bf16.msra.mxu0 %v269
  %347 = vmatprep.mubr.bf16.mxu0 %v133
  %348 = vmatmul.mubr.bf16.gmra.mrb[0].mxu0 %v132
  %v349 = vpop.f32.mrb[0].mxu0
  %v350 = vadd.f32 %v106, %v349
  %v351 = vpop.f32.mrb[0].mxu0
  %v352 = vpop.f32.mrb[0].mxu0
  %v353 = vadd.f32 %v106, %v352
  %v354 = vpop.f32.mrb[0].mxu0
  %355 = vmatprep.mubr.bf16.mxu0 %v137
  %356 = vmatmul.mubr.bf16.gmra.mrb[0].mxu0 %v136
  %v357 = vpop.f32.mrb[0].mxu0
  %v358 = vadd.f32 %v106, %v357
  %v359 = vpop.f32.mrb[0].mxu0
  %v360 = vpop.f32.mrb[0].mxu0
  %v361 = vadd.f32 %v106, %v360
  %v362 = vpop.f32.mrb[0].mxu0
  %363 = vdwg.mxu0
  %364 = vmatprep.subr.bf16.mxu0 0
  %365 = vmatpush1.bf16.msra.mxu0 %v270
  %366 = vmatprep.subr.bf16.mxu0 0
  %367 = vmatpush1.bf16.msra.mxu0 %v271
  %368 = vmatprep.subr.bf16.mxu0 0
  %369 = vmatpush1.bf16.msra.mxu0 %v272
  %370 = vmatprep.subr.bf16.mxu0 0
  %371 = vmatpush1.bf16.msra.mxu0 %v273
  %372 = vmatprep.subr.bf16.mxu0 0
  %373 = vmatpush1.bf16.msra.mxu0 %v274
  %374 = vmatprep.subr.bf16.mxu0 0
  %375 = vmatpush1.bf16.msra.mxu0 %v275
  %376 = vmatprep.subr.bf16.mxu0 0
  %377 = vmatpush1.bf16.msra.mxu0 %v276
  %378 = vmatprep.subr.bf16.mxu0 0
  %379 = vmatpush1.bf16.msra.mxu0 %v277
  %380 = vmatprep.subr.bf16.mxu0 0
  %381 = vmatpush1.bf16.msra.mxu0 %v278
  %382 = vmatprep.subr.bf16.mxu0 0
  %383 = vmatpush1.bf16.msra.mxu0 %v279
  %384 = vmatprep.subr.bf16.mxu0 0
  %385 = vmatpush1.bf16.msra.mxu0 %v280
  %386 = vmatprep.subr.bf16.mxu0 0
  %387 = vmatpush1.bf16.msra.mxu0 0
  %388 = vmatprep.subr.bf16.mxu0 0
  %389 = vmatpush1.bf16.msra.mxu0 0
  %390 = vmatprep.subr.bf16.mxu0 0
  %391 = vmatpush1.bf16.msra.mxu0 0
  %392 = vmatprep.subr.bf16.mxu0 0
  %393 = vmatpush1.bf16.msra.mxu0 0
  %394 = vmatprep.subr.bf16.mxu0 0
  %395 = vmatpush1.bf16.msra.mxu0 0
  %396 = vmatprep.mubr.bf16.mxu0 %v310
  %397 = vmatmul.mubr.bf16.gmra.mrb[0].mxu0 %v134
  %v398 = vpop.f32.mrb[0].mxu0
  %v399 = vadd.f32 %v350, %v398
  %v400 = vpop.f32.mrb[0].mxu0
  %v401 = vpop.f32.mrb[0].mxu0
  %v402 = vadd.f32 %v353, %v401
  %v403 = vpop.f32.mrb[0].mxu0
  %404 = vmatprep.mubr.bf16.mxu0 %v313
  %405 = vmatmul.mubr.bf16.gmra.mrb[0].mxu0 %v138
  %v406 = vpop.f32.mrb[0].mxu0
  %v407 = vadd.f32 %v358, %v406
  %v408 = vpop.f32.mrb[0].mxu0
  %v409 = vpop.f32.mrb[0].mxu0
  %v410 = vadd.f32 %v361, %v409
  %v411 = vpop.f32.mrb[0].mxu0
  %412 = vdwg.mxu0
  %v413 = vmax.f32 %v399, 0.0
  %v414 = vmax.f32 %v402, 0.0
  %v415 = vmax.f32 %v407, 0.0
  %v416 = vmax.f32 %v410, 0.0
  %v417 = vpack.c.bf16 %v414, %v413
  %v418 = vpack.c.bf16 %v416, %v415
  %419 = vst [vmem:[#allocation2] sm:$0xff] %v417
  %420 = vst [vmem:[#allocation2 + $0x8] sm:$0xff] %v418
  %v421 = vld [vmem:[#allocation2] sm:$0xf]
  %v422 = vld [vmem:[%s3] sm:$0xf]
  %v423 = vld [vmem:[%s3 + $0x4] sm:$0xf]
  %v424 = vld [vmem:[%s3 + $0x8] sm:$0xf]
  %v425 = vld [vmem:[%s3 + $0xc] sm:$0xf]
  %v426 = vld [vmem:[%s3 + $0x10] sm:$0xf]
  %v427 = vld [vmem:[%s3 + $0x14] sm:$0xf]
  %v428 = vld [vmem:[%s3 + $0x18] sm:$0xf]
  %v429 = vld [vmem:[%s3 + $0x1c] sm:$0xf]
  %v430 = vld [vmem:[%s3 + $0x20] sm:$0xf]
  %v431 = vld [vmem:[%s3 + $0x24] sm:$0xf]
  %v432 = vld [vmem:[%s3 + $0x28] sm:$0xf]
  %v433 = vld [vmem:[%s3 + $0x2c] sm:$0xf]
  %v434 = vld [vmem:[%s3 + $0x30] sm:$0xf]
  %v435 = vld [vmem:[%s3 + $0x34] sm:$0xf]
  %v436 = vld [vmem:[%s3 + $0x38] sm:$0xf]
  %v437 = vld [vmem:[%s3 + $0x3c] sm:$0xf]
  %v438 = vld [vmem:[#allocation2] sm:$0xf0]
  %s439 = scalar_lea.vmem %s3, 64
  %v440 = vld [vmem:[%s439] sm:$0xf]
  %v441 = vld [vmem:[%s439 + $0x4] sm:$0xf]
  %v442 = vld [vmem:[%s439 + $0x8] sm:$0xf]
  %v443 = vld [vmem:[%s439 + $0xc] sm:$0xf]
  %v444 = vld [vmem:[%s439 + $0x10] sm:$0xf]
  %v445 = vld [vmem:[%s439 + $0x14] sm:$0xf]
  %v446 = vld [vmem:[%s439 + $0x18] sm:$0xf]
  %v447 = vld [vmem:[%s439 + $0x1c] sm:$0xf]
  %v448 = vld [vmem:[%s439 + $0x20] sm:$0xf]
  %v449 = vld [vmem:[%s439 + $0x24] sm:$0xf]
  %v450 = vld [vmem:[%s439 + $0x28] sm:$0xf]
  %v451 = vld [vmem:[%s439 + $0x2c] sm:$0xf]
  %v452 = vld [vmem:[%s439 + $0x30] sm:$0xf]
  %v453 = vld [vmem:[%s439 + $0x34] sm:$0xf]
  %v454 = vld [vmem:[%s439 + $0x38] sm:$0xf]
  %v455 = vld [vmem:[%s439 + $0x3c] sm:$0xf]
  %v457 = vrot.slane %v438, 4
  %v475 = vunpack.c.l.b16 %v440
  %v476 = vunpack.c.l.b16 %v441
  %v477 = vunpack.c.l.b16 %v442
  %v478 = vunpack.c.l.b16 %v443
  %v479 = vunpack.c.l.b16 %v444
  %v480 = vunpack.c.l.b16 %v445
  %v481 = vunpack.c.l.b16 %v446
  %v482 = vunpack.c.l.b16 %v447
  %v483 = vunpack.c.l.b16 %v448
  %v484 = vunpack.c.l.b16 %v449
  %v485 = vunpack.c.l.b16 %v450
  %v486 = vunpack.c.l.b16 %v451
  %v487 = vunpack.c.l.b16 %v452
  %v488 = vunpack.c.l.b16 %v453
  %v489 = vunpack.c.l.b16 %v454
  %v490 = vunpack.c.l.b16 %v455
  %v491 = vpack.c.b16 %v476, %v475
  %v492 = vpack.c.b16 %v478, %v477
  %v493 = vpack.c.b16 %v480, %v479
  %v494 = vpack.c.b16 %v482, %v481
  %v495 = vpack.c.b16 %v484, %v483
  %v496 = vpack.c.b16 %v486, %v485
  %v497 = vpack.c.b16 %v488, %v487
  %v498 = vpack.c.b16 %v490, %v489
  %507 = vmatprep.subr.bf16.mxu0 0
  %508 = vmatpush1.bf16.msra.mxu0 %v491
  %509 = vmatprep.subr.bf16.mxu0 0
  %510 = vmatpush1.bf16.msra.mxu0 %v492
  %511 = vmatprep.subr.bf16.mxu0 0
  %512 = vmatpush1.bf16.msra.mxu0 %v493
  %513 = vmatprep.subr.bf16.mxu0 0
  %514 = vmatpush1.bf16.msra.mxu0 %v494
  %515 = vmatprep.subr.bf16.mxu0 0
  %516 = vmatpush1.bf16.msra.mxu0 %v495
  %517 = vmatprep.subr.bf16.mxu0 0
  %518 = vmatpush1.bf16.msra.mxu0 %v496
  %519 = vmatprep.subr.bf16.mxu0 0
  %520 = vmatpush1.bf16.msra.mxu0 %v497
  %521 = vmatprep.subr.bf16.mxu0 0
  %522 = vmatpush1.bf16.msra.mxu0 %v498
  %523 = vmatprep.subr.bf16.mxu0 0
  %524 = vmatpush1.bf16.msra.mxu0 0
  %525 = vmatprep.subr.bf16.mxu0 0
  %526 = vmatpush1.bf16.msra.mxu0 0
  %527 = vmatprep.subr.bf16.mxu0 0
  %528 = vmatpush1.bf16.msra.mxu0 0
  %529 = vmatprep.subr.bf16.mxu0 0
  %530 = vmatpush1.bf16.msra.mxu0 0
  %531 = vmatprep.subr.bf16.mxu0 0
  %532 = vmatpush1.bf16.msra.mxu0 0
  %533 = vmatprep.subr.bf16.mxu0 0
  %534 = vmatpush1.bf16.msra.mxu0 0
  %535 = vmatprep.subr.bf16.mxu0 0
  %536 = vmatpush1.bf16.msra.mxu0 0
  %537 = vmatprep.subr.bf16.mxu0 0
  %538 = vmatpush1.bf16.msra.mxu0 0
  %539 = vmatprep.mubr.bf16.mxu0 0
  %540 = vmatmul.mubr.bf16.gmra.mrb[0].mxu0 %v457
  %v541 = vpop.f32.mrb[0].mxu0
  %v542 = vadd.f32 0.0, %v541
  %v543 = vpop.f32.mrb[0].mxu0
  %v544 = vpop.f32.mrb[0].mxu0
  %v545 = vpop.f32.mrb[0].mxu0
  %546 = vdwg.mxu0
  %v563 = vunpack.c.l.b16 %v422
  %v564 = vunpack.c.l.b16 %v423
  %v565 = vunpack.c.l.b16 %v424
  %v566 = vunpack.c.l.b16 %v425
  %v567 = vunpack.c.l.b16 %v426
  %v568 = vunpack.c.l.b16 %v427
  %v569 = vunpack.c.l.b16 %v428
  %v570 = vunpack.c.l.b16 %v429
  %v571 = vunpack.c.l.b16 %v430
  %v572 = vunpack.c.l.b16 %v431
  %v573 = vunpack.c.l.b16 %v432
  %v574 = vunpack.c.l.b16 %v433
  %v575 = vunpack.c.l.b16 %v434
  %v576 = vunpack.c.l.b16 %v435
  %v577 = vunpack.c.l.b16 %v436
  %v578 = vunpack.c.l.b16 %v437
  %v579 = vpack.c.b16 %v564, %v563
  %v580 = vpack.c.b16 %v566, %v565
  %v581 = vpack.c.b16 %v568, %v567
  %v582 = vpack.c.b16 %v570, %v569
  %v583 = vpack.c.b16 %v572, %v571
  %v584 = vpack.c.b16 %v574, %v573
  %v585 = vpack.c.b16 %v576, %v575
  %v586 = vpack.c.b16 %v578, %v577
  %595 = vmatprep.subr.bf16.mxu0 0
  %596 = vmatpush1.bf16.msra.mxu0 %v579
  %597 = vmatprep.subr.bf16.mxu0 0
  %598 = vmatpush1.bf16.msra.mxu0 %v580
  %599 = vmatprep.subr.bf16.mxu0 0
  %600 = vmatpush1.bf16.msra.mxu0 %v581
  %601 = vmatprep.subr.bf16.mxu0 0
  %602 = vmatpush1.bf16.msra.mxu0 %v582
  %603 = vmatprep.subr.bf16.mxu0 0
  %604 = vmatpush1.bf16.msra.mxu0 %v583
  %605 = vmatprep.subr.bf16.mxu0 0
  %606 = vmatpush1.bf16.msra.mxu0 %v584
  %607 = vmatprep.subr.bf16.mxu0 0
  %608 = vmatpush1.bf16.msra.mxu0 %v585
  %609 = vmatprep.subr.bf16.mxu0 0
  %610 = vmatpush1.bf16.msra.mxu0 %v586
  %611 = vmatprep.subr.bf16.mxu0 0
  %612 = vmatpush1.bf16.msra.mxu0 0
  %613 = vmatprep.subr.bf16.mxu0 0
  %614 = vmatpush1.bf16.msra.mxu0 0
  %615 = vmatprep.subr.bf16.mxu0 0
  %616 = vmatpush1.bf16.msra.mxu0 0
  %617 = vmatprep.subr.bf16.mxu0 0
  %618 = vmatpush1.bf16.msra.mxu0 0
  %619 = vmatprep.subr.bf16.mxu0 0
  %620 = vmatpush1.bf16.msra.mxu0 0
  %621 = vmatprep.subr.bf16.mxu0 0
  %622 = vmatpush1.bf16.msra.mxu0 0
  %623 = vmatprep.subr.bf16.mxu0 0
  %624 = vmatpush1.bf16.msra.mxu0 0
  %625 = vmatprep.subr.bf16.mxu0 0
  %626 = vmatpush1.bf16.msra.mxu0 0
  %627 = vmatprep.mubr.bf16.mxu0 0
  %628 = vmatmul.mubr.bf16.gmra.mrb[0].mxu0 %v421
  %v629 = vpop.f32.mrb[0].mxu0
  %v630 = vadd.f32 %v542, %v629
  %v631 = vpop.f32.mrb[0].mxu0
  %v632 = vpop.f32.mrb[0].mxu0
  %v633 = vpop.f32.mrb[0].mxu0
  %634 = vdwg.mxu0
  %v635 = vld [vmem:[#allocation2 + $0x8] sm:$0xf]
  %s636 = scalar_lea.vmem %s3, 128
  %v637 = vld [vmem:[%s636] sm:$0xf]
  %v638 = vld [vmem:[%s636 + $0x4] sm:$0xf]
  %v639 = vld [vmem:[%s636 + $0x8] sm:$0xf]
  %v640 = vld [vmem:[%s636 + $0xc] sm:$0xf]
  %v641 = vld [vmem:[%s636 + $0x10] sm:$0xf]
  %v642 = vld [vmem:[%s636 + $0x14] sm:$0xf]
  %v643 = vld [vmem:[%s636 + $0x18] sm:$0xf]
  %v644 = vld [vmem:[%s636 + $0x1c] sm:$0xf]
  %v645 = vld [vmem:[%s636 + $0x20] sm:$0xf]
  %v646 = vld [vmem:[%s636 + $0x24] sm:$0xf]
  %v647 = vld [vmem:[%s636 + $0x28] sm:$0xf]
  %v648 = vld [vmem:[%s636 + $0x2c] sm:$0xf]
  %v649 = vld [vmem:[%s636 + $0x30] sm:$0xf]
  %v650 = vld [vmem:[%s636 + $0x34] sm:$0xf]
  %v651 = vld [vmem:[%s636 + $0x38] sm:$0xf]
  %v652 = vld [vmem:[%s636 + $0x3c] sm:$0xf]
  %v669 = vunpack.c.l.b16 %v637
  %v670 = vunpack.c.l.b16 %v638
  %v671 = vunpack.c.l.b16 %v639
  %v672 = vunpack.c.l.b16 %v640
  %v673 = vunpack.c.l.b16 %v641
  %v674 = vunpack.c.l.b16 %v642
  %v675 = vunpack.c.l.b16 %v643
  %v676 = vunpack.c.l.b16 %v644
  %v677 = vunpack.c.l.b16 %v645
  %v678 = vunpack.c.l.b16 %v646
  %v679 = vunpack.c.l.b16 %v647
  %v680 = vunpack.c.l.b16 %v648
  %v681 = vunpack.c.l.b16 %v649
  %v682 = vunpack.c.l.b16 %v650
  %v683 = vunpack.c.l.b16 %v651
  %v684 = vunpack.c.l.b16 %v652
  %v685 = vpack.c.b16 %v670, %v669
  %v686 = vpack.c.b16 %v672, %v671
  %v687 = vpack.c.b16 %v674, %v673
  %v688 = vpack.c.b16 %v676, %v675
  %v689 = vpack.c.b16 %v678, %v677
  %v690 = vpack.c.b16 %v680, %v679
  %v691 = vpack.c.b16 %v682, %v681
  %v692 = vpack.c.b16 %v684, %v683
  %701 = vmatprep.subr.bf16.mxu0 0
  %702 = vmatpush1.bf16.msra.mxu0 %v685
  %703 = vmatprep.subr.bf16.mxu0 0
  %704 = vmatpush1.bf16.msra.mxu0 %v686
  %705 = vmatprep.subr.bf16.mxu0 0
  %706 = vmatpush1.bf16.msra.mxu0 %v687
  %707 = vmatprep.subr.bf16.mxu0 0
  %708 = vmatpush1.bf16.msra.mxu0 %v688
  %709 = vmatprep.subr.bf16.mxu0 0
  %710 = vmatpush1.bf16.msra.mxu0 %v689
  %711 = vmatprep.subr.bf16.mxu0 0
  %712 = vmatpush1.bf16.msra.mxu0 %v690
  %713 = vmatprep.subr.bf16.mxu0 0
  %714 = vmatpush1.bf16.msra.mxu0 %v691
  %715 = vmatprep.subr.bf16.mxu0 0
  %716 = vmatpush1.bf16.msra.mxu0 %v692
  %717 = vmatprep.subr.bf16.mxu0 0
  %718 = vmatpush1.bf16.msra.mxu0 0
  %719 = vmatprep.subr.bf16.mxu0 0
  %720 = vmatpush1.bf16.msra.mxu0 0
  %721 = vmatprep.subr.bf16.mxu0 0
  %722 = vmatpush1.bf16.msra.mxu0 0
  %723 = vmatprep.subr.bf16.mxu0 0
  %724 = vmatpush1.bf16.msra.mxu0 0
  %725 = vmatprep.subr.bf16.mxu0 0
  %726 = vmatpush1.bf16.msra.mxu0 0
  %727 = vmatprep.subr.bf16.mxu0 0
  %728 = vmatpush1.bf16.msra.mxu0 0
  %729 = vmatprep.subr.bf16.mxu0 0
  %730 = vmatpush1.bf16.msra.mxu0 0
  %731 = vmatprep.subr.bf16.mxu0 0
  %732 = vmatpush1.bf16.msra.mxu0 0
  %733 = vmatprep.mubr.bf16.mxu0 0
  %734 = vmatmul.mubr.bf16.gmra.mrb[0].mxu0 %v635
  %v735 = vpop.f32.mrb[0].mxu0
  %v736 = vadd.f32 0.0, %v735
  %v737 = vpop.f32.mrb[0].mxu0
  %v738 = vpop.f32.mrb[0].mxu0
  %v739 = vpop.f32.mrb[0].mxu0
  %740 = vdwg.mxu0
  %v741 = vadd.f32 %v630, %v736
  %v742 = vld [vmem:[#allocation2 + $0x8] sm:$0xf0]
  %s743 = scalar_lea.vmem %s3, 192
  %v744 = vld [vmem:[%s743] sm:$0xf]
  %v745 = vld [vmem:[%s743 + $0x4] sm:$0xf]
  %v746 = vld [vmem:[%s743 + $0x8] sm:$0xf]
  %v747 = vld [vmem:[%s743 + $0xc] sm:$0xf]
  %v748 = vld [vmem:[%s743 + $0x10] sm:$0xf]
  %v749 = vld [vmem:[%s743 + $0x14] sm:$0xf]
  %v750 = vld [vmem:[%s743 + $0x18] sm:$0xf]
  %v751 = vld [vmem:[%s743 + $0x1c] sm:$0xf]
  %v752 = vld [vmem:[%s743 + $0x20] sm:$0xf]
  %v753 = vld [vmem:[%s743 + $0x24] sm:$0xf]
  %v754 = vld [vmem:[%s743 + $0x28] sm:$0xf]
  %v755 = vld [vmem:[%s743 + $0x2c] sm:$0xf]
  %v756 = vld [vmem:[%s743 + $0x30] sm:$0xf]
  %v757 = vld [vmem:[%s743 + $0x34] sm:$0xf]
  %v758 = vld [vmem:[%s743 + $0x38] sm:$0xf]
  %v759 = vld [vmem:[%s743 + $0x3c] sm:$0xf]
  %v761 = vrot.slane %v742, 4
  %v779 = vunpack.c.l.b16 %v744
  %v780 = vunpack.c.l.b16 %v745
  %v781 = vunpack.c.l.b16 %v746
  %v782 = vunpack.c.l.b16 %v747
  %v783 = vunpack.c.l.b16 %v748
  %v784 = vunpack.c.l.b16 %v749
  %v785 = vunpack.c.l.b16 %v750
  %v786 = vunpack.c.l.b16 %v751
  %v787 = vunpack.c.l.b16 %v752
  %v788 = vunpack.c.l.b16 %v753
  %v789 = vunpack.c.l.b16 %v754
  %v790 = vunpack.c.l.b16 %v755
  %v791 = vunpack.c.l.b16 %v756
  %v792 = vunpack.c.l.b16 %v757
  %v793 = vunpack.c.l.b16 %v758
  %v794 = vunpack.c.l.b16 %v759
  %v795 = vpack.c.b16 %v780, %v779
  %v796 = vpack.c.b16 %v782, %v781
  %v797 = vpack.c.b16 %v784, %v783
  %v798 = vpack.c.b16 %v786, %v785
  %v799 = vpack.c.b16 %v788, %v787
  %v800 = vpack.c.b16 %v790, %v789
  %v801 = vpack.c.b16 %v792, %v791
  %v802 = vpack.c.b16 %v794, %v793
  %811 = vmatprep.subr.bf16.mxu0 0
  %812 = vmatpush1.bf16.msra.mxu0 %v795
  %813 = vmatprep.subr.bf16.mxu0 0
  %814 = vmatpush1.bf16.msra.mxu0 %v796
  %815 = vmatprep.subr.bf16.mxu0 0
  %816 = vmatpush1.bf16.msra.mxu0 %v797
  %817 = vmatprep.subr.bf16.mxu0 0
  %818 = vmatpush1.bf16.msra.mxu0 %v798
  %819 = vmatprep.subr.bf16.mxu0 0
  %820 = vmatpush1.bf16.msra.mxu0 %v799
  %821 = vmatprep.subr.bf16.mxu0 0
  %822 = vmatpush1.bf16.msra.mxu0 %v800
  %823 = vmatprep.subr.bf16.mxu0 0
  %824 = vmatpush1.bf16.msra.mxu0 %v801
  %825 = vmatprep.subr.bf16.mxu0 0
  %826 = vmatpush1.bf16.msra.mxu0 %v802
  %827 = vmatprep.subr.bf16.mxu0 0
  %828 = vmatpush1.bf16.msra.mxu0 0
  %829 = vmatprep.subr.bf16.mxu0 0
  %830 = vmatpush1.bf16.msra.mxu0 0
  %831 = vmatprep.subr.bf16.mxu0 0
  %832 = vmatpush1.bf16.msra.mxu0 0
  %833 = vmatprep.subr.bf16.mxu0 0
  %834 = vmatpush1.bf16.msra.mxu0 0
  %835 = vmatprep.subr.bf16.mxu0 0
  %836 = vmatpush1.bf16.msra.mxu0 0
  %837 = vmatprep.subr.bf16.mxu0 0
  %838 = vmatpush1.bf16.msra.mxu0 0
  %839 = vmatprep.subr.bf16.mxu0 0
  %840 = vmatpush1.bf16.msra.mxu0 0
  %841 = vmatprep.subr.bf16.mxu0 0
  %842 = vmatpush1.bf16.msra.mxu0 0
  %843 = vmatprep.mubr.bf16.mxu0 0
  %844 = vmatmul.mubr.bf16.gmra.mrb[0].mxu0 %v761
  %v845 = vpop.f32.mrb[0].mxu0
  %v846 = vadd.f32 0.0, %v845
  %v847 = vpop.f32.mrb[0].mxu0
  %v848 = vpop.f32.mrb[0].mxu0
  %v849 = vpop.f32.mrb[0].mxu0
  %850 = vdwg.mxu0
  %v851 = vadd.f32 %v741, %v846
  %v852 = vld [vmem:[%s4] sm:$0x1]
  %v854 = vlaneseq
  %v855 = vshrl.u32 %v854, 7
  %v856 = vsub.s32 0, %v855
  %v857 = vrot.slane %v852, %v856
  %v859 = vadd.f32 %v851, %v857
  %v860 = vmax.f32 %v859, 0.0
  %v861 = vpack.c.bf16 %v860, %v860
  %862 = vst [vmem:[#allocation3] sm:$0xf] %v861
  %v863 = vld [vmem:[#allocation2 + $0x8] sm:$0x7]
  %v864 = vld [vmem:[%s3] sm:$0xf]
  %v865 = vld [vmem:[%s3 + $0x4] sm:$0xf]
  %v866 = vld [vmem:[%s3 + $0x8] sm:$0xf]
  %v867 = vld [vmem:[%s3 + $0xc] sm:$0xf]
  %v868 = vld [vmem:[%s3 + $0x10] sm:$0xf]
  %v869 = vld [vmem:[%s3 + $0x14] sm:$0xf]
  %v870 = vld [vmem:[%s3 + $0x18] sm:$0xf]
  %v871 = vld [vmem:[%s3 + $0x1c] sm:$0xf]
  %v872 = vld [vmem:[%s3 + $0x20] sm:$0xf]
  %v873 = vld [vmem:[%s3 + $0x24] sm:$0xf]
  %v874 = vld [vmem:[%s3 + $0x28] sm:$0xf]
  %v875 = vld [vmem:[%s3 + $0x2c] sm:$0xf]
  %v876 = vld [vmem:[%s3 + $0x30] sm:$0xf]
  %v877 = vld [vmem:[%s3 + $0x34] sm:$0xf]
  %v878 = vld [vmem:[%s3 + $0x38] sm:$0xf]
  %v879 = vld [vmem:[%s3 + $0x3c] sm:$0xf]
  %v880 = vld [vmem:[#allocation2 + $0x8] sm:$0x70]
  %v881 = vld [vmem:[%s439] sm:$0xf]
  %v882 = vld [vmem:[%s439 + $0x4] sm:$0xf]
  %v883 = vld [vmem:[%s439 + $0x8] sm:$0xf]
  %v884 = vld [vmem:[%s439 + $0xc] sm:$0xf]
  %v885 = vld [vmem:[%s439 + $0x10] sm:$0xf]
  %v886 = vld [vmem:[%s439 + $0x14] sm:$0xf]
  %v887 = vld [vmem:[%s439 + $0x18] sm:$0xf]
  %v888 = vld [vmem:[%s439 + $0x1c] sm:$0xf]
  %v889 = vld [vmem:[%s439 + $0x20] sm:$0xf]
  %v890 = vld [vmem:[%s439 + $0x24] sm:$0xf]
  %v891 = vld [vmem:[%s439 + $0x28] sm:$0xf]
  %v892 = vld [vmem:[%s439 + $0x2c] sm:$0xf]
  %v893 = vld [vmem:[%s439 + $0x30] sm:$0xf]
  %v894 = vld [vmem:[%s439 + $0x34] sm:$0xf]
  %v895 = vld [vmem:[%s439 + $0x38] sm:$0xf]
  %v896 = vld [vmem:[%s439 + $0x3c] sm:$0xf]
  %v898 = vrot.slane %v880, 4
  %v916 = vunpack.c.l.b16 %v881
  %v917 = vunpack.c.l.b16 %v882
  %v918 = vunpack.c.l.b16 %v883
  %v919 = vunpack.c.l.b16 %v884
  %v920 = vunpack.c.l.b16 %v885
  %v921 = vunpack.c.l.b16 %v886
  %v922 = vunpack.c.l.b16 %v887
  %v923 = vunpack.c.l.b16 %v888
  %v924 = vunpack.c.l.b16 %v889
  %v925 = vunpack.c.l.b16 %v890
  %v926 = vunpack.c.l.b16 %v891
  %v927 = vunpack.c.l.b16 %v892
  %v928 = vunpack.c.l.b16 %v893
  %v929 = vunpack.c.l.b16 %v894
  %v930 = vunpack.c.l.b16 %v895
  %v931 = vunpack.c.l.b16 %v896
  %v932 = vpack.c.b16 %v917, %v916
  %v933 = vpack.c.b16 %v919, %v918
  %v934 = vpack.c.b16 %v921, %v920
  %v935 = vpack.c.b16 %v923, %v922
  %v936 = vpack.c.b16 %v925, %v924
  %v937 = vpack.c.b16 %v927, %v926
  %v938 = vpack.c.b16 %v929, %v928
  %v939 = vpack.c.b16 %v931, %v930
  %948 = vmatprep.subr.bf16.mxu0 0
  %949 = vmatpush1.bf16.msra.mxu0 %v932
  %950 = vmatprep.subr.bf16.mxu0 0
  %951 = vmatpush1.bf16.msra.mxu0 %v933
  %952 = vmatprep.subr.bf16.mxu0 0
  %953 = vmatpush1.bf16.msra.mxu0 %v934
  %954 = vmatprep.subr.bf16.mxu0 0
  %955 = vmatpush1.bf16.msra.mxu0 %v935
  %956 = vmatprep.subr.bf16.mxu0 0
  %957 = vmatpush1.bf16.msra.mxu0 %v936
  %958 = vmatprep.subr.bf16.mxu0 0
  %959 = vmatpush1.bf16.msra.mxu0 %v937
  %960 = vmatprep.subr.bf16.mxu0 0
  %961 = vmatpush1.bf16.msra.mxu0 %v938
  %962 = vmatprep.subr.bf16.mxu0 0
  %963 = vmatpush1.bf16.msra.mxu0 %v939
  %964 = vmatprep.subr.bf16.mxu0 0
  %965 = vmatpush1.bf16.msra.mxu0 0
  %966 = vmatprep.subr.bf16.mxu0 0
  %967 = vmatpush1.bf16.msra.mxu0 0
  %968 = vmatprep.subr.bf16.mxu0 0
  %969 = vmatpush1.bf16.msra.mxu0 0
  %970 = vmatprep.subr.bf16.mxu0 0
  %971 = vmatpush1.bf16.msra.mxu0 0
  %972 = vmatprep.subr.bf16.mxu0 0
  %973 = vmatpush1.bf16.msra.mxu0 0
  %974 = vmatprep.subr.bf16.mxu0 0
  %975 = vmatpush1.bf16.msra.mxu0 0
  %976 = vmatprep.subr.bf16.mxu0 0
  %977 = vmatpush1.bf16.msra.mxu0 0
  %978 = vmatprep.subr.bf16.mxu0 0
  %979 = vmatpush1.bf16.msra.mxu0 0
  %980 = vmatprep.mubr.bf16.mxu0 0
  %981 = vmatmul.mubr.bf16.gmra.mrb[0].mxu0 %v898
  %v982 = vpop.f32.mrb[0].mxu0
  %v983 = vadd.f32 0.0, %v982
  %v984 = vpop.f32.mrb[0].mxu0
  %v985 = vpop.f32.mrb[0].mxu0
  %v986 = vpop.f32.mrb[0].mxu0
  %987 = vdwg.mxu0
  %v1004 = vunpack.c.l.b16 %v864
  %v1005 = vunpack.c.l.b16 %v865
  %v1006 = vunpack.c.l.b16 %v866
  %v1007 = vunpack.c.l.b16 %v867
  %v1008 = vunpack.c.l.b16 %v868
  %v1009 = vunpack.c.l.b16 %v869
  %v1010 = vunpack.c.l.b16 %v870
  %v1011 = vunpack.c.l.b16 %v871
  %v1012 = vunpack.c.l.b16 %v872
  %v1013 = vunpack.c.l.b16 %v873
  %v1014 = vunpack.c.l.b16 %v874
  %v1015 = vunpack.c.l.b16 %v875
  %v1016 = vunpack.c.l.b16 %v876
  %v1017 = vunpack.c.l.b16 %v877
  %v1018 = vunpack.c.l.b16 %v878
  %v1019 = vunpack.c.l.b16 %v879
  %v1020 = vpack.c.b16 %v1005, %v1004
  %v1021 = vpack.c.b16 %v1007, %v1006
  %v1022 = vpack.c.b16 %v1009, %v1008
  %v1023 = vpack.c.b16 %v1011, %v1010
  %v1024 = vpack.c.b16 %v1013, %v1012
  %v1025 = vpack.c.b16 %v1015, %v1014
  %v1026 = vpack.c.b16 %v1017, %v1016
  %v1027 = vpack.c.b16 %v1019, %v1018
  %1036 = vmatprep.subr.bf16.mxu0 0
  %1037 = vmatpush1.bf16.msra.mxu0 %v1020
  %1038 = vmatprep.subr.bf16.mxu0 0
  %1039 = vmatpush1.bf16.msra.mxu0 %v1021
  %1040 = vmatprep.subr.bf16.mxu0 0
  %1041 = vmatpush1.bf16.msra.mxu0 %v1022
  %1042 = vmatprep.subr.bf16.mxu0 0
  %1043 = vmatpush1.bf16.msra.mxu0 %v1023
  %1044 = vmatprep.subr.bf16.mxu0 0
  %1045 = vmatpush1.bf16.msra.mxu0 %v1024
  %1046 = vmatprep.subr.bf16.mxu0 0
  %1047 = vmatpush1.bf16.msra.mxu0 %v1025
  %1048 = vmatprep.subr.bf16.mxu0 0
  %1049 = vmatpush1.bf16.msra.mxu0 %v1026
  %1050 = vmatprep.subr.bf16.mxu0 0
  %1051 = vmatpush1.bf16.msra.mxu0 %v1027
  %1052 = vmatprep.subr.bf16.mxu0 0
  %1053 = vmatpush1.bf16.msra.mxu0 0
  %1054 = vmatprep.subr.bf16.mxu0 0
  %1055 = vmatpush1.bf16.msra.mxu0 0
  %1056 = vmatprep.subr.bf16.mxu0 0
  %1057 = vmatpush1.bf16.msra.mxu0 0
  %1058 = vmatprep.subr.bf16.mxu0 0
  %1059 = vmatpush1.bf16.msra.mxu0 0
  %1060 = vmatprep.subr.bf16.mxu0 0
  %1061 = vmatpush1.bf16.msra.mxu0 0
  %1062 = vmatprep.subr.bf16.mxu0 0
  %1063 = vmatpush1.bf16.msra.mxu0 0
  %1064 = vmatprep.subr.bf16.mxu0 0
  %1065 = vmatpush1.bf16.msra.mxu0 0
  %1066 = vmatprep.subr.bf16.mxu0 0
  %1067 = vmatpush1.bf16.msra.mxu0 0
  %1068 = vmatprep.mubr.bf16.mxu0 0
  %1069 = vmatmul.mubr.bf16.gmra.mrb[0].mxu0 %v863
  %v1070 = vpop.f32.mrb[0].mxu0
  %v1071 = vadd.f32 %v983, %v1070
  %v1072 = vpop.f32.mrb[0].mxu0
  %v1073 = vpop.f32.mrb[0].mxu0
  %v1074 = vpop.f32.mrb[0].mxu0
  %1075 = vdwg.mxu0
  %v1076 = vld [vmem:[#allocation2] sm:$0xe]
  %v1077 = vld [vmem:[%s636] sm:$0xf]
  %v1078 = vld [vmem:[%s636 + $0x4] sm:$0xf]
  %v1079 = vld [vmem:[%s636 + $0x8] sm:$0xf]
  %v1080 = vld [vmem:[%s636 + $0xc] sm:$0xf]
  %v1081 = vld [vmem:[%s636 + $0x10] sm:$0xf]
  %v1082 = vld [vmem:[%s636 + $0x14] sm:$0xf]
  %v1083 = vld [vmem:[%s636 + $0x18] sm:$0xf]
  %v1084 = vld [vmem:[%s636 + $0x1c] sm:$0xf]
  %v1085 = vld [vmem:[%s636 + $0x20] sm:$0xf]
  %v1086 = vld [vmem:[%s636 + $0x24] sm:$0xf]
  %v1087 = vld [vmem:[%s636 + $0x28] sm:$0xf]
  %v1088 = vld [vmem:[%s636 + $0x2c] sm:$0xf]
  %v1089 = vld [vmem:[%s636 + $0x30] sm:$0xf]
  %v1090 = vld [vmem:[%s636 + $0x34] sm:$0xf]
  %v1091 = vld [vmem:[%s636 + $0x38] sm:$0xf]
  %v1092 = vld [vmem:[%s636 + $0x3c] sm:$0xf]
  %v1094 = vrot.slane %v1076, 1
  %v1112 = vunpack.c.l.b16 %v1077
  %v1113 = vunpack.c.l.b16 %v1078
  %v1114 = vunpack.c.l.b16 %v1079
  %v1115 = vunpack.c.l.b16 %v1080
  %v1116 = vunpack.c.l.b16 %v1081
  %v1117 = vunpack.c.l.b16 %v1082
  %v1118 = vunpack.c.l.b16 %v1083
  %v1119 = vunpack.c.l.b16 %v1084
  %v1120 = vunpack.c.l.b16 %v1085
  %v1121 = vunpack.c.l.b16 %v1086
  %v1122 = vunpack.c.l.b16 %v1087
  %v1123 = vunpack.c.l.b16 %v1088
  %v1124 = vunpack.c.l.b16 %v1089
  %v1125 = vunpack.c.l.b16 %v1090
  %v1126 = vunpack.c.l.b16 %v1091
  %v1127 = vunpack.c.l.b16 %v1092
  %v1128 = vpack.c.b16 %v1113, %v1112
  %v1129 = vpack.c.b16 %v1115, %v1114
  %v1130 = vpack.c.b16 %v1117, %v1116
  %v1131 = vpack.c.b16 %v1119, %v1118
  %v1132 = vpack.c.b16 %v1121, %v1120
  %v1133 = vpack.c.b16 %v1123, %v1122
  %v1134 = vpack.c.b16 %v1125, %v1124
  %v1135 = vpack.c.b16 %v1127, %v1126
  %1144 = vmatprep.subr.bf16.mxu0 0
  %1145 = vmatpush1.bf16.msra.mxu0 %v1128
  %1146 = vmatprep.subr.bf16.mxu0 0
  %1147 = vmatpush1.bf16.msra.mxu0 %v1129
  %1148 = vmatprep.subr.bf16.mxu0 0
  %1149 = vmatpush1.bf16.msra.mxu0 %v1130
  %1150 = vmatprep.subr.bf16.mxu0 0
  %1151 = vmatpush1.bf16.msra.mxu0 %v1131
  %1152 = vmatprep.subr.bf16.mxu0 0
  %1153 = vmatpush1.bf16.msra.mxu0 %v1132
  %1154 = vmatprep.subr.bf16.mxu0 0
  %1155 = vmatpush1.bf16.msra.mxu0 %v1133
  %1156 = vmatprep.subr.bf16.mxu0 0
  %1157 = vmatpush1.bf16.msra.mxu0 %v1134
  %1158 = vmatprep.subr.bf16.mxu0 0
  %1159 = vmatpush1.bf16.msra.mxu0 %v1135
  %1160 = vmatprep.subr.bf16.mxu0 0
  %1161 = vmatpush1.bf16.msra.mxu0 0
  %1162 = vmatprep.subr.bf16.mxu0 0
  %1163 = vmatpush1.bf16.msra.mxu0 0
  %1164 = vmatprep.subr.bf16.mxu0 0
  %1165 = vmatpush1.bf16.msra.mxu0 0
  %1166 = vmatprep.subr.bf16.mxu0 0
  %1167 = vmatpush1.bf16.msra.mxu0 0
  %1168 = vmatprep.subr.bf16.mxu0 0
  %1169 = vmatpush1.bf16.msra.mxu0 0
  %1170 = vmatprep.subr.bf16.mxu0 0
  %1171 = vmatpush1.bf16.msra.mxu0 0
  %1172 = vmatprep.subr.bf16.mxu0 0
  %1173 = vmatpush1.bf16.msra.mxu0 0
  %1174 = vmatprep.subr.bf16.mxu0 0
  %1175 = vmatpush1.bf16.msra.mxu0 0
  %1176 = vmatprep.mubr.bf16.mxu0 0
  %1177 = vmatmul.mubr.bf16.gmra.mrb[0].mxu0 %v1094
  %v1178 = vpop.f32.mrb[0].mxu0
  %v1179 = vadd.f32 0.0, %v1178
  %v1180 = vpop.f32.mrb[0].mxu0
  %v1181 = vpop.f32.mrb[0].mxu0
  %v1182 = vpop.f32.mrb[0].mxu0
  %1183 = vdwg.mxu0
  %v1184 = vadd.f32 %v1071, %v1179
  %v1185 = vld [vmem:[#allocation2] sm:$0xe0]
  %v1186 = vld [vmem:[%s743] sm:$0xf]
  %v1187 = vld [vmem:[%s743 + $0x4] sm:$0xf]
  %v1188 = vld [vmem:[%s743 + $0x8] sm:$0xf]
  %v1189 = vld [vmem:[%s743 + $0xc] sm:$0xf]
  %v1190 = vld [vmem:[%s743 + $0x10] sm:$0xf]
  %v1191 = vld [vmem:[%s743 + $0x14] sm:$0xf]
  %v1192 = vld [vmem:[%s743 + $0x18] sm:$0xf]
  %v1193 = vld [vmem:[%s743 + $0x1c] sm:$0xf]
  %v1194 = vld [vmem:[%s743 + $0x20] sm:$0xf]
  %v1195 = vld [vmem:[%s743 + $0x24] sm:$0xf]
  %v1196 = vld [vmem:[%s743 + $0x28] sm:$0xf]
  %v1197 = vld [vmem:[%s743 + $0x2c] sm:$0xf]
  %v1198 = vld [vmem:[%s743 + $0x30] sm:$0xf]
  %v1199 = vld [vmem:[%s743 + $0x34] sm:$0xf]
  %v1200 = vld [vmem:[%s743 + $0x38] sm:$0xf]
  %v1201 = vld [vmem:[%s743 + $0x3c] sm:$0xf]
  %v1203 = vrot.slane %v1185, 5
  %v1221 = vunpack.c.l.b16 %v1186
  %v1222 = vunpack.c.l.b16 %v1187
  %v1223 = vunpack.c.l.b16 %v1188
  %v1224 = vunpack.c.l.b16 %v1189
  %v1225 = vunpack.c.l.b16 %v1190
  %v1226 = vunpack.c.l.b16 %v1191
  %v1227 = vunpack.c.l.b16 %v1192
  %v1228 = vunpack.c.l.b16 %v1193
  %v1229 = vunpack.c.l.b16 %v1194
  %v1230 = vunpack.c.l.b16 %v1195
  %v1231 = vunpack.c.l.b16 %v1196
  %v1232 = vunpack.c.l.b16 %v1197
  %v1233 = vunpack.c.l.b16 %v1198
  %v1234 = vunpack.c.l.b16 %v1199
  %v1235 = vunpack.c.l.b16 %v1200
  %v1236 = vunpack.c.l.b16 %v1201
  %v1237 = vpack.c.b16 %v1222, %v1221
  %v1238 = vpack.c.b16 %v1224, %v1223
  %v1239 = vpack.c.b16 %v1226, %v1225
  %v1240 = vpack.c.b16 %v1228, %v1227
  %v1241 = vpack.c.b16 %v1230, %v1229
  %v1242 = vpack.c.b16 %v1232, %v1231
  %v1243 = vpack.c.b16 %v1234, %v1233
  %v1244 = vpack.c.b16 %v1236, %v1235
  %1253 = vmatprep.subr.bf16.mxu0 0
  %1254 = vmatpush1.bf16.msra.mxu0 %v1237
  %1255 = vmatprep.subr.bf16.mxu0 0
  %1256 = vmatpush1.bf16.msra.mxu0 %v1238
  %1257 = vmatprep.subr.bf16.mxu0 0
  %1258 = vmatpush1.bf16.msra.mxu0 %v1239
  %1259 = vmatprep.subr.bf16.mxu0 0
  %1260 = vmatpush1.bf16.msra.mxu0 %v1240
  %1261 = vmatprep.subr.bf16.mxu0 0
  %1262 = vmatpush1.bf16.msra.mxu0 %v1241
  %1263 = vmatprep.subr.bf16.mxu0 0
  %1264 = vmatpush1.bf16.msra.mxu0 %v1242
  %1265 = vmatprep.subr.bf16.mxu0 0
  %1266 = vmatpush1.bf16.msra.mxu0 %v1243
  %1267 = vmatprep.subr.bf16.mxu0 0
  %1268 = vmatpush1.bf16.msra.mxu0 %v1244
  %1269 = vmatprep.subr.bf16.mxu0 0
  %1270 = vmatpush1.bf16.msra.mxu0 0
  %1271 = vmatprep.subr.bf16.mxu0 0
  %1272 = vmatpush1.bf16.msra.mxu0 0
  %1273 = vmatprep.subr.bf16.mxu0 0
  %1274 = vmatpush1.bf16.msra.mxu0 0
  %1275 = vmatprep.subr.bf16.mxu0 0
  %1276 = vmatpush1.bf16.msra.mxu0 0
  %1277 = vmatprep.subr.bf16.mxu0 0
  %1278 = vmatpush1.bf16.msra.mxu0 0
  %1279 = vmatprep.subr.bf16.mxu0 0
  %1280 = vmatpush1.bf16.msra.mxu0 0
  %1281 = vmatprep.subr.bf16.mxu0 0
  %1282 = vmatpush1.bf16.msra.mxu0 0
  %1283 = vmatprep.subr.bf16.mxu0 0
  %1284 = vmatpush1.bf16.msra.mxu0 0
  %1285 = vmatprep.mubr.bf16.mxu0 0
  %1286 = vmatmul.mubr.bf16.gmra.mrb[0].mxu0 %v1203
  %v1287 = vpop.f32.mrb[0].mxu0
  %v1288 = vadd.f32 0.0, %v1287
  %v1289 = vpop.f32.mrb[0].mxu0
  %v1290 = vpop.f32.mrb[0].mxu0
  %v1291 = vpop.f32.mrb[0].mxu0
  %1292 = vdwg.mxu0
  %v1293 = vadd.f32 %v1184, %v1288
  %v1294 = vld [vmem:[%s4] sm:$0x1]
  %v1296 = vlaneseq
  %v1297 = vshrl.u32 %v1296, 7
  %v1298 = vsub.s32 0, %v1297
  %v1299 = vrot.slane %v1294, %v1298
  %v1301 = vadd.f32 %v1293, %v1299
  %v1302 = vmax.f32 %v1301, 0.0
  %v1303 = vpack.c.bf16 %v1302, %v1302
  %1304 = vst [vmem:[#allocation3 + $0x4] sm:$0x7] %v1303
  %v1305 = vld [vmem:[#allocation3] sm:$0x7]
  %v1306 = vld [vmem:[%s5] sm:$0xf]
  %v1307 = vld [vmem:[%s5 + $0x4] sm:$0xf]
  %v1308 = vld [vmem:[%s5 + $0x8] sm:$0xf]
  %v1309 = vld [vmem:[%s5 + $0xc] sm:$0xf]
  %v1310 = vld [vmem:[%s5 + $0x10] sm:$0xf]
  %v1311 = vld [vmem:[%s5 + $0x14] sm:$0xf]
  %v1312 = vld [vmem:[%s5 + $0x18] sm:$0xf]
  %v1313 = vld [vmem:[%s5 + $0x1c] sm:$0xf]
  %v1314 = vld [vmem:[%s5 + $0x20] sm:$0xf]
  %v1315 = vld [vmem:[%s5 + $0x24] sm:$0xf]
  %v1316 = vld [vmem:[%s5 + $0x28] sm:$0xf]
  %v1317 = vld [vmem:[%s5 + $0x2c] sm:$0xf]
  %v1318 = vld [vmem:[%s5 + $0x30] sm:$0xf]
  %v1319 = vld [vmem:[%s5 + $0x34] sm:$0xf]
  %v1320 = vld [vmem:[%s5 + $0x38] sm:$0xf]
  %v1321 = vld [vmem:[%s5 + $0x3c] sm:$0xf]
  %v1322 = vld [vmem:[#allocation3 + $0x4] sm:$0x7]
  %s1323 = scalar_lea.vmem %s5, 64
  %v1324 = vld [vmem:[%s1323] sm:$0xf]
  %v1325 = vld [vmem:[%s1323 + $0x4] sm:$0xf]
  %v1326 = vld [vmem:[%s1323 + $0x8] sm:$0xf]
  %v1327 = vld [vmem:[%s1323 + $0xc] sm:$0xf]
  %v1328 = vld [vmem:[%s1323 + $0x10] sm:$0xf]
  %v1329 = vld [vmem:[%s1323 + $0x14] sm:$0xf]
  %v1330 = vld [vmem:[%s1323 + $0x18] sm:$0xf]
  %v1331 = vld [vmem:[%s1323 + $0x1c] sm:$0xf]
  %v1332 = vld [vmem:[%s1323 + $0x20] sm:$0xf]
  %v1333 = vld [vmem:[%s1323 + $0x24] sm:$0xf]
  %v1334 = vld [vmem:[%s1323 + $0x28] sm:$0xf]
  %v1335 = vld [vmem:[%s1323 + $0x2c] sm:$0xf]
  %v1336 = vld [vmem:[%s1323 + $0x30] sm:$0xf]
  %v1337 = vld [vmem:[%s1323 + $0x34] sm:$0xf]
  %v1338 = vld [vmem:[%s1323 + $0x38] sm:$0xf]
  %v1339 = vld [vmem:[%s1323 + $0x3c] sm:$0xf]
  %v1356 = vunpack.c.l.b16 %v1324
  %v1357 = vunpack.c.l.b16 %v1325
  %v1358 = vunpack.c.l.b16 %v1326
  %v1359 = vunpack.c.l.b16 %v1327
  %v1360 = vunpack.c.l.b16 %v1328
  %v1361 = vunpack.c.l.b16 %v1329
  %v1362 = vunpack.c.l.b16 %v1330
  %v1363 = vunpack.c.l.b16 %v1331
  %v1364 = vunpack.c.l.b16 %v1332
  %v1365 = vunpack.c.l.b16 %v1333
  %v1366 = vunpack.c.l.b16 %v1334
  %v1367 = vunpack.c.l.b16 %v1335
  %v1368 = vunpack.c.l.b16 %v1336
  %v1369 = vunpack.c.l.b16 %v1337
  %v1370 = vunpack.c.l.b16 %v1338
  %v1371 = vunpack.c.l.b16 %v1339
  %v1372 = vpack.c.b16 %v1357, %v1356
  %v1373 = vpack.c.b16 %v1359, %v1358
  %v1374 = vpack.c.b16 %v1361, %v1360
  %v1375 = vpack.c.b16 %v1363, %v1362
  %v1376 = vpack.c.b16 %v1365, %v1364
  %v1377 = vpack.c.b16 %v1367, %v1366
  %v1378 = vpack.c.b16 %v1369, %v1368
  %v1379 = vpack.c.b16 %v1371, %v1370
  %1388 = vmatprep.subr.bf16.mxu0 0
  %1389 = vmatpush1.bf16.msra.mxu0 %v1372
  %1390 = vmatprep.subr.bf16.mxu0 0
  %1391 = vmatpush1.bf16.msra.mxu0 %v1373
  %1392 = vmatprep.subr.bf16.mxu0 0
  %1393 = vmatpush1.bf16.msra.mxu0 %v1374
  %1394 = vmatprep.subr.bf16.mxu0 0
  %1395 = vmatpush1.bf16.msra.mxu0 %v1375
  %1396 = vmatprep.subr.bf16.mxu0 0
  %1397 = vmatpush1.bf16.msra.mxu0 %v1376
  %1398 = vmatprep.subr.bf16.mxu0 0
  %1399 = vmatpush1.bf16.msra.mxu0 %v1377
  %1400 = vmatprep.subr.bf16.mxu0 0
  %1401 = vmatpush1.bf16.msra.mxu0 %v1378
  %1402 = vmatprep.subr.bf16.mxu0 0
  %1403 = vmatpush1.bf16.msra.mxu0 %v1379
  %1404 = vmatprep.subr.bf16.mxu0 0
  %1405 = vmatpush1.bf16.msra.mxu0 0
  %1406 = vmatprep.subr.bf16.mxu0 0
  %1407 = vmatpush1.bf16.msra.mxu0 0
  %1408 = vmatprep.subr.bf16.mxu0 0
  %1409 = vmatpush1.bf16.msra.mxu0 0
  %1410 = vmatprep.subr.bf16.mxu0 0
  %1411 = vmatpush1.bf16.msra.mxu0 0
  %1412 = vmatprep.subr.bf16.mxu0 0
  %1413 = vmatpush1.bf16.msra.mxu0 0
  %1414 = vmatprep.subr.bf16.mxu0 0
  %1415 = vmatpush1.bf16.msra.mxu0 0
  %1416 = vmatprep.subr.bf16.mxu0 0
  %1417 = vmatpush1.bf16.msra.mxu0 0
  %1418 = vmatprep.subr.bf16.mxu0 0
  %1419 = vmatpush1.bf16.msra.mxu0 0
  %1420 = vmatprep.mubr.bf16.mxu0 0
  %1421 = vmatmul.mubr.bf16.gmra.mrb[0].mxu0 %v1322
  %v1422 = vpop.f32.mrb[0].mxu0
  %v1423 = vadd.f32 0.0, %v1422
  %v1424 = vpop.f32.mrb[0].mxu0
  %v1425 = vpop.f32.mrb[0].mxu0
  %v1426 = vpop.f32.mrb[0].mxu0
  %1427 = vdwg.mxu0
  %v1444 = vunpack.c.l.b16 %v1306
  %v1445 = vunpack.c.l.b16 %v1307
  %v1446 = vunpack.c.l.b16 %v1308
  %v1447 = vunpack.c.l.b16 %v1309
  %v1448 = vunpack.c.l.b16 %v1310
  %v1449 = vunpack.c.l.b16 %v1311
  %v1450 = vunpack.c.l.b16 %v1312
  %v1451 = vunpack.c.l.b16 %v1313
  %v1452 = vunpack.c.l.b16 %v1314
  %v1453 = vunpack.c.l.b16 %v1315
  %v1454 = vunpack.c.l.b16 %v1316
  %v1455 = vunpack.c.l.b16 %v1317
  %v1456 = vunpack.c.l.b16 %v1318
  %v1457 = vunpack.c.l.b16 %v1319
  %v1458 = vunpack.c.l.b16 %v1320
  %v1459 = vunpack.c.l.b16 %v1321
  %v1460 = vpack.c.b16 %v1445, %v1444
  %v1461 = vpack.c.b16 %v1447, %v1446
  %v1462 = vpack.c.b16 %v1449, %v1448
  %v1463 = vpack.c.b16 %v1451, %v1450
  %v1464 = vpack.c.b16 %v1453, %v1452
  %v1465 = vpack.c.b16 %v1455, %v1454
  %v1466 = vpack.c.b16 %v1457, %v1456
  %v1467 = vpack.c.b16 %v1459, %v1458
  %1476 = vmatprep.subr.bf16.mxu0 0
  %1477 = vmatpush1.bf16.msra.mxu0 %v1460
  %1478 = vmatprep.subr.bf16.mxu0 0
  %1479 = vmatpush1.bf16.msra.mxu0 %v1461
  %1480 = vmatprep.subr.bf16.mxu0 0
  %1481 = vmatpush1.bf16.msra.mxu0 %v1462
  %1482 = vmatprep.subr.bf16.mxu0 0
  %1483 = vmatpush1.bf16.msra.mxu0 %v1463
  %1484 = vmatprep.subr.bf16.mxu0 0
  %1485 = vmatpush1.bf16.msra.mxu0 %v1464
  %1486 = vmatprep.subr.bf16.mxu0 0
  %1487 = vmatpush1.bf16.msra.mxu0 %v1465
  %1488 = vmatprep.subr.bf16.mxu0 0
  %1489 = vmatpush1.bf16.msra.mxu0 %v1466
  %1490 = vmatprep.subr.bf16.mxu0 0
  %1491 = vmatpush1.bf16.msra.mxu0 %v1467
  %1492 = vmatprep.subr.bf16.mxu0 0
  %1493 = vmatpush1.bf16.msra.mxu0 0
  %1494 = vmatprep.subr.bf16.mxu0 0
  %1495 = vmatpush1.bf16.msra.mxu0 0
  %1496 = vmatprep.subr.bf16.mxu0 0
  %1497 = vmatpush1.bf16.msra.mxu0 0
  %1498 = vmatprep.subr.bf16.mxu0 0
  %1499 = vmatpush1.bf16.msra.mxu0 0
  %1500 = vmatprep.subr.bf16.mxu0 0
  %1501 = vmatpush1.bf16.msra.mxu0 0
  %1502 = vmatprep.subr.bf16.mxu0 0
  %1503 = vmatpush1.bf16.msra.mxu0 0
  %1504 = vmatprep.subr.bf16.mxu0 0
  %1505 = vmatpush1.bf16.msra.mxu0 0
  %1506 = vmatprep.subr.bf16.mxu0 0
  %1507 = vmatpush1.bf16.msra.mxu0 0
  %1508 = vmatprep.mubr.bf16.mxu0 0
  %1509 = vmatmul.mubr.bf16.gmra.mrb[0].mxu0 %v1305
  %v1510 = vpop.f32.mrb[0].mxu0
  %v1511 = vadd.f32 %v1423, %v1510
  %v1512 = vpop.f32.mrb[0].mxu0
  %v1513 = vpop.f32.mrb[0].mxu0
  %v1514 = vpop.f32.mrb[0].mxu0
  %1515 = vdwg.mxu0
  %v1516 = vld [vmem:[#allocation3] sm:$0xe]
  %s1517 = scalar_lea.vmem %s5, 128
  %v1518 = vld [vmem:[%s1517] sm:$0xf]
  %v1519 = vld [vmem:[%s1517 + $0x4] sm:$0xf]
  %v1520 = vld [vmem:[%s1517 + $0x8] sm:$0xf]
  %v1521 = vld [vmem:[%s1517 + $0xc] sm:$0xf]
  %v1522 = vld [vmem:[%s1517 + $0x10] sm:$0xf]
  %v1523 = vld [vmem:[%s1517 + $0x14] sm:$0xf]
  %v1524 = vld [vmem:[%s1517 + $0x18] sm:$0xf]
  %v1525 = vld [vmem:[%s1517 + $0x1c] sm:$0xf]
  %v1526 = vld [vmem:[%s1517 + $0x20] sm:$0xf]
  %v1527 = vld [vmem:[%s1517 + $0x24] sm:$0xf]
  %v1528 = vld [vmem:[%s1517 + $0x28] sm:$0xf]
  %v1529 = vld [vmem:[%s1517 + $0x2c] sm:$0xf]
  %v1530 = vld [vmem:[%s1517 + $0x30] sm:$0xf]
  %v1531 = vld [vmem:[%s1517 + $0x34] sm:$0xf]
  %v1532 = vld [vmem:[%s1517 + $0x38] sm:$0xf]
  %v1533 = vld [vmem:[%s1517 + $0x3c] sm:$0xf]
  %v1535 = vunpack.c.l.b16 %v1516
  %v1536 = vpack.c.b16 %v1535, %v1535
  %v1537 = vrot.slane %v1536, 1
  %v1555 = vunpack.c.l.b16 %v1518
  %v1556 = vunpack.c.l.b16 %v1519
  %v1557 = vunpack.c.l.b16 %v1520
  %v1558 = vunpack.c.l.b16 %v1521
  %v1559 = vunpack.c.l.b16 %v1522
  %v1560 = vunpack.c.l.b16 %v1523
  %v1561 = vunpack.c.l.b16 %v1524
  %v1562 = vunpack.c.l.b16 %v1525
  %v1563 = vunpack.c.l.b16 %v1526
  %v1564 = vunpack.c.l.b16 %v1527
  %v1565 = vunpack.c.l.b16 %v1528
  %v1566 = vunpack.c.l.b16 %v1529
  %v1567 = vunpack.c.l.b16 %v1530
  %v1568 = vunpack.c.l.b16 %v1531
  %v1569 = vunpack.c.l.b16 %v1532
  %v1570 = vunpack.c.l.b16 %v1533
  %v1571 = vpack.c.b16 %v1556, %v1555
  %v1572 = vpack.c.b16 %v1558, %v1557
  %v1573 = vpack.c.b16 %v1560, %v1559
  %v1574 = vpack.c.b16 %v1562, %v1561
  %v1575 = vpack.c.b16 %v1564, %v1563
  %v1576 = vpack.c.b16 %v1566, %v1565
  %v1577 = vpack.c.b16 %v1568, %v1567
  %v1578 = vpack.c.b16 %v1570, %v1569
  %1587 = vmatprep.subr.bf16.mxu0 0
  %1588 = vmatpush1.bf16.msra.mxu0 %v1571
  %1589 = vmatprep.subr.bf16.mxu0 0
  %1590 = vmatpush1.bf16.msra.mxu0 %v1572
  %1591 = vmatprep.subr.bf16.mxu0 0
  %1592 = vmatpush1.bf16.msra.mxu0 %v1573
  %1593 = vmatprep.subr.bf16.mxu0 0
  %1594 = vmatpush1.bf16.msra.mxu0 %v1574
  %1595 = vmatprep.subr.bf16.mxu0 0
  %1596 = vmatpush1.bf16.msra.mxu0 %v1575
  %1597 = vmatprep.subr.bf16.mxu0 0
  %1598 = vmatpush1.bf16.msra.mxu0 %v1576
  %1599 = vmatprep.subr.bf16.mxu0 0
  %1600 = vmatpush1.bf16.msra.mxu0 %v1577
  %1601 = vmatprep.subr.bf16.mxu0 0
  %1602 = vmatpush1.bf16.msra.mxu0 %v1578
  %1603 = vmatprep.subr.bf16.mxu0 0
  %1604 = vmatpush1.bf16.msra.mxu0 0
  %1605 = vmatprep.subr.bf16.mxu0 0
  %1606 = vmatpush1.bf16.msra.mxu0 0
  %1607 = vmatprep.subr.bf16.mxu0 0
  %1608 = vmatpush1.bf16.msra.mxu0 0
  %1609 = vmatprep.subr.bf16.mxu0 0
  %1610 = vmatpush1.bf16.msra.mxu0 0
  %1611 = vmatprep.subr.bf16.mxu0 0
  %1612 = vmatpush1.bf16.msra.mxu0 0
  %1613 = vmatprep.subr.bf16.mxu0 0
  %1614 = vmatpush1.bf16.msra.mxu0 0
  %1615 = vmatprep.subr.bf16.mxu0 0
  %1616 = vmatpush1.bf16.msra.mxu0 0
  %1617 = vmatprep.subr.bf16.mxu0 0
  %1618 = vmatpush1.bf16.msra.mxu0 0
  %1619 = vmatprep.mubr.bf16.mxu0 0
  %1620 = vmatmul.mubr.bf16.gmra.mrb[0].mxu0 %v1537
  %v1621 = vpop.f32.mrb[0].mxu0
  %v1622 = vadd.f32 0.0, %v1621
  %v1623 = vpop.f32.mrb[0].mxu0
  %v1624 = vpop.f32.mrb[0].mxu0
  %v1625 = vpop.f32.mrb[0].mxu0
  %1626 = vdwg.mxu0
  %v1627 = vadd.f32 %v1511, %v1622
  %v1628 = vld [vmem:[%s6] sm:$0x1]
  %v1630 = vlaneseq
  %v1631 = vshrl.u32 %v1630, 7
  %v1632 = vsub.s32 0, %v1631
  %v1633 = vrot.slane %v1628, %v1632
  %v1635 = vadd.f32 %v1627, %v1633
  %v1636 = vmax.f32 %v1635, 0.0
  %v1637 = vpack.c.bf16 %v1636, %v1636
  %1638 = vst [vmem:[#allocation4] sm:$0x7] %v1637
  %v1639 = vld [vmem:[#allocation4] sm:$0x1]
  %v1640 = vld [vmem:[%s7] sm:$0xff]
  %v1641 = vld [vmem:[%s7 + $0x8] sm:$0xf]
  %v1642 = vld [vmem:[%s7 + $0xc] sm:$0xff]
  %v1643 = vld [vmem:[%s7 + $0x14] sm:$0xf]
  %v1644 = vld [vmem:[%s7 + $0x18] sm:$0xff]
  %v1645 = vld [vmem:[%s7 + $0x20] sm:$0xf]
  %v1646 = vld [vmem:[%s7 + $0x24] sm:$0xff]
  %v1647 = vld [vmem:[%s7 + $0x2c] sm:$0xf]
  %v1648 = vld [vmem:[%s7 + $0x30] sm:$0xff]
  %v1649 = vld [vmem:[%s7 + $0x38] sm:$0xf]
  %v1650 = vld [vmem:[%s7 + $0x3c] sm:$0xff]
  %v1651 = vld [vmem:[%s7 + $0x44] sm:$0xf]
  %v1652 = vld [vmem:[%s7 + $0x48] sm:$0xff]
  %v1653 = vld [vmem:[%s7 + $0x50] sm:$0xf]
  %v1654 = vld [vmem:[%s7 + $0x54] sm:$0xff]
  %v1655 = vld [vmem:[%s7 + $0x5c] sm:$0xf]
  %v1656 = vld [vmem:[%s7 + $0x60] sm:$0xff]
  %v1657 = vld [vmem:[%s7 + $0x68] sm:$0xf]
  %v1658 = vld [vmem:[%s7 + $0x6c] sm:$0xff]
  %v1659 = vld [vmem:[%s7 + $0x74] sm:$0xf]
  %v1660 = vld [vmem:[%s7 + $0x78] sm:$0xff]
  %v1661 = vld [vmem:[%s7 + $0x80] sm:$0xf]
  %v1662 = vld [vmem:[%s7 + $0x84] sm:$0xff]
  %v1663 = vld [vmem:[%s7 + $0x8c] sm:$0xf]
  %v1664 = vld [vmem:[%s7 + $0x90] sm:$0xff]
  %v1665 = vld [vmem:[%s7 + $0x98] sm:$0xf]
  %v1666 = vld [vmem:[%s7 + $0x9c] sm:$0xff]
  %v1667 = vld [vmem:[%s7 + $0xa4] sm:$0xf]
  %v1668 = vld [vmem:[%s7 + $0xa8] sm:$0xff]
  %v1669 = vld [vmem:[%s7 + $0xb0] sm:$0xf]
  %v1670 = vld [vmem:[%s7 + $0xb4] sm:$0xff]
  %v1671 = vld [vmem:[%s7 + $0xbc] sm:$0xf]
  %v1672 = vld [vmem:[#allocation4] sm:$0x2]
  %s1673 = scalar_lea.vmem %s7, 192
  %v1674 = vld [vmem:[%s1673] sm:$0xff]
  %v1675 = vld [vmem:[%s1673 + $0x8] sm:$0xf]
  %v1676 = vld [vmem:[%s1673 + $0xc] sm:$0xff]
  %v1677 = vld [vmem:[%s1673 + $0x14] sm:$0xf]
  %v1678 = vld [vmem:[%s1673 + $0x18] sm:$0xff]
  %v1679 = vld [vmem:[%s1673 + $0x20] sm:$0xf]
  %v1680 = vld [vmem:[%s1673 + $0x24] sm:$0xff]
  %v1681 = vld [vmem:[%s1673 + $0x2c] sm:$0xf]
  %v1682 = vld [vmem:[%s1673 + $0x30] sm:$0xff]
  %v1683 = vld [vmem:[%s1673 + $0x38] sm:$0xf]
  %v1684 = vld [vmem:[%s1673 + $0x3c] sm:$0xff]
  %v1685 = vld [vmem:[%s1673 + $0x44] sm:$0xf]
  %v1686 = vld [vmem:[%s1673 + $0x48] sm:$0xff]
  %v1687 = vld [vmem:[%s1673 + $0x50] sm:$0xf]
  %v1688 = vld [vmem:[%s1673 + $0x54] sm:$0xff]
  %v1689 = vld [vmem:[%s1673 + $0x5c] sm:$0xf]
  %v1690 = vld [vmem:[%s1673 + $0x60] sm:$0xff]
  %v1691 = vld [vmem:[%s1673 + $0x68] sm:$0xf]
  %v1692 = vld [vmem:[%s1673 + $0x6c] sm:$0xff]
  %v1693 = vld [vmem:[%s1673 + $0x74] sm:$0xf]
  %v1694 = vld [vmem:[%s1673 + $0x78] sm:$0xff]
  %v1695 = vld [vmem:[%s1673 + $0x80] sm:$0xf]
  %v1696 = vld [vmem:[%s1673 + $0x84] sm:$0xff]
  %v1697 = vld [vmem:[%s1673 + $0x8c] sm:$0xf]
  %v1698 = vld [vmem:[%s1673 + $0x90] sm:$0xff]
  %v1699 = vld [vmem:[%s1673 + $0x98] sm:$0xf]
  %v1700 = vld [vmem:[%s1673 + $0x9c] sm:$0xff]
  %v1701 = vld [vmem:[%s1673 + $0xa4] sm:$0xf]
  %v1702 = vld [vmem:[%s1673 + $0xa8] sm:$0xff]
  %v1703 = vld [vmem:[%s1673 + $0xb0] sm:$0xf]
  %v1704 = vld [vmem:[%s1673 + $0xb4] sm:$0xff]
  %v1705 = vld [vmem:[%s1673 + $0xbc] sm:$0xf]
  %v1707 = vunpack.c.l.b16 %v1672
  %v1708 = vpack.c.b16 %v1707, %v1707
  %v1709 = vrot.slane %v1708, 1
  %v1743 = vunpack.c.l.b16 %v1674
  %v1744 = vunpack.c.h.b16 %v1674
  %v1745 = vunpack.c.l.b16 %v1675
  %v1746 = vunpack.c.l.b16 %v1676
  %v1747 = vunpack.c.h.b16 %v1676
  %v1748 = vunpack.c.l.b16 %v1677
  %v1749 = vunpack.c.l.b16 %v1678
  %v1750 = vunpack.c.h.b16 %v1678
  %v1751 = vunpack.c.l.b16 %v1679
  %v1752 = vunpack.c.l.b16 %v1680
  %v1753 = vunpack.c.h.b16 %v1680
  %v1754 = vunpack.c.l.b16 %v1681
  %v1755 = vunpack.c.l.b16 %v1682
  %v1756 = vunpack.c.h.b16 %v1682
  %v1757 = vunpack.c.l.b16 %v1683
  %v1758 = vunpack.c.l.b16 %v1684
  %v1759 = vunpack.c.h.b16 %v1684
  %v1760 = vunpack.c.l.b16 %v1685
  %v1761 = vunpack.c.l.b16 %v1686
  %v1762 = vunpack.c.h.b16 %v1686
  %v1763 = vunpack.c.l.b16 %v1687
  %v1764 = vunpack.c.l.b16 %v1688
  %v1765 = vunpack.c.h.b16 %v1688
  %v1766 = vunpack.c.l.b16 %v1689
  %v1767 = vunpack.c.l.b16 %v1690
  %v1768 = vunpack.c.h.b16 %v1690
  %v1769 = vunpack.c.l.b16 %v1691
  %v1770 = vunpack.c.l.b16 %v1692
  %v1771 = vunpack.c.h.b16 %v1692
  %v1772 = vunpack.c.l.b16 %v1693
  %v1773 = vunpack.c.l.b16 %v1694
  %v1774 = vunpack.c.h.b16 %v1694
  %v1775 = vunpack.c.l.b16 %v1695
  %v1776 = vunpack.c.l.b16 %v1696
  %v1777 = vunpack.c.h.b16 %v1696
  %v1778 = vunpack.c.l.b16 %v1697
  %v1779 = vunpack.c.l.b16 %v1698
  %v1780 = vunpack.c.h.b16 %v1698
  %v1781 = vunpack.c.l.b16 %v1699
  %v1782 = vunpack.c.l.b16 %v1700
  %v1783 = vunpack.c.h.b16 %v1700
  %v1784 = vunpack.c.l.b16 %v1701
  %v1785 = vunpack.c.l.b16 %v1702
  %v1786 = vunpack.c.h.b16 %v1702
  %v1787 = vunpack.c.l.b16 %v1703
  %v1788 = vunpack.c.l.b16 %v1704
  %v1789 = vunpack.c.h.b16 %v1704
  %v1790 = vunpack.c.l.b16 %v1705
  %v1791 = vpack.c.b16 %v1746, %v1743
  %v1792 = vpack.c.b16 %v1747, %v1744
  %v1793 = vpack.c.b16 %v1748, %v1745
  %v1794 = vpack.c.b16 %v1752, %v1749
  %v1795 = vpack.c.b16 %v1753, %v1750
  %v1796 = vpack.c.b16 %v1754, %v1751
  %v1797 = vpack.c.b16 %v1758, %v1755
  %v1798 = vpack.c.b16 %v1759, %v1756
  %v1799 = vpack.c.b16 %v1760, %v1757
  %v1800 = vpack.c.b16 %v1764, %v1761
  %v1801 = vpack.c.b16 %v1765, %v1762
  %v1802 = vpack.c.b16 %v1766, %v1763
  %v1803 = vpack.c.b16 %v1770, %v1767
  %v1804 = vpack.c.b16 %v1771, %v1768
  %v1805 = vpack.c.b16 %v1772, %v1769
  %v1806 = vpack.c.b16 %v1776, %v1773
  %v1807 = vpack.c.b16 %v1777, %v1774
  %v1808 = vpack.c.b16 %v1778, %v1775
  %v1809 = vpack.c.b16 %v1782, %v1779
  %v1810 = vpack.c.b16 %v1783, %v1780
  %v1811 = vpack.c.b16 %v1784, %v1781
  %v1812 = vpack.c.b16 %v1788, %v1785
  %v1813 = vpack.c.b16 %v1789, %v1786
  %v1814 = vpack.c.b16 %v1790, %v1787
  %1839 = vmatprep.subr.bf16.mxu0 %v1792
  %1840 = vmatpush1.bf16.msra.mxu0 %v1791
  %1841 = vmatprep.subr.bf16.mxu0 %v1795
  %1842 = vmatpush1.bf16.msra.mxu0 %v1794
  %1843 = vmatprep.subr.bf16.mxu0 %v1798
  %1844 = vmatpush1.bf16.msra.mxu0 %v1797
  %1845 = vmatprep.subr.bf16.mxu0 %v1801
  %1846 = vmatpush1.bf16.msra.mxu0 %v1800
  %1847 = vmatprep.subr.bf16.mxu0 %v1804
  %1848 = vmatpush1.bf16.msra.mxu0 %v1803
  %1849 = vmatprep.subr.bf16.mxu0 %v1807
  %1850 = vmatpush1.bf16.msra.mxu0 %v1806
  %1851 = vmatprep.subr.bf16.mxu0 %v1810
  %1852 = vmatpush1.bf16.msra.mxu0 %v1809
  %1853 = vmatprep.subr.bf16.mxu0 %v1813
  %1854 = vmatpush1.bf16.msra.mxu0 %v1812
  %1855 = vmatprep.subr.bf16.mxu0 0
  %1856 = vmatpush1.bf16.msra.mxu0 0
  %1857 = vmatprep.subr.bf16.mxu0 0
  %1858 = vmatpush1.bf16.msra.mxu0 0
  %1859 = vmatprep.subr.bf16.mxu0 0
  %1860 = vmatpush1.bf16.msra.mxu0 0
  %1861 = vmatprep.subr.bf16.mxu0 0
  %1862 = vmatpush1.bf16.msra.mxu0 0
  %1863 = vmatprep.subr.bf16.mxu0 0
  %1864 = vmatpush1.bf16.msra.mxu0 0
  %1865 = vmatprep.subr.bf16.mxu0 0
  %1866 = vmatpush1.bf16.msra.mxu0 0
  %1867 = vmatprep.subr.bf16.mxu0 0
  %1868 = vmatpush1.bf16.msra.mxu0 0
  %1869 = vmatprep.subr.bf16.mxu0 0
  %1870 = vmatpush1.bf16.msra.mxu0 0
  %1871 = vmatprep.mubr.bf16.mxu0 0
  %1872 = vmatmul.mubr.bf16.gmra.mrb[0].mxu0 %v1709
  %v1873 = vpop.f32.mrb[0].mxu0
  %v1874 = vadd.f32 0.0, %v1873
  %v1875 = vpop.f32.mrb[0].mxu0
  %v1876 = vadd.f32 0.0, %v1875
  %v1877 = vpop.f32.mrb[0].mxu0
  %v1878 = vpop.f32.mrb[0].mxu0
  %1879 = vdwg.mxu0
  %1880 = vmatprep.subr.bf16.mxu0 0
  %1881 = vmatpush1.bf16.msra.mxu0 %v1793
  %1882 = vmatprep.subr.bf16.mxu0 0
  %1883 = vmatpush1.bf16.msra.mxu0 %v1796
  %1884 = vmatprep.subr.bf16.mxu0 0
  %1885 = vmatpush1.bf16.msra.mxu0 %v1799
  %1886 = vmatprep.subr.bf16.mxu0 0
  %1887 = vmatpush1.bf16.msra.mxu0 %v1802
  %1888 = vmatprep.subr.bf16.mxu0 0
  %1889 = vmatpush1.bf16.msra.mxu0 %v1805
  %1890 = vmatprep.subr.bf16.mxu0 0
  %1891 = vmatpush1.bf16.msra.mxu0 %v1808
  %1892 = vmatprep.subr.bf16.mxu0 0
  %1893 = vmatpush1.bf16.msra.mxu0 %v1811
  %1894 = vmatprep.subr.bf16.mxu0 0
  %1895 = vmatpush1.bf16.msra.mxu0 %v1814
  %1896 = vmatprep.subr.bf16.mxu0 0
  %1897 = vmatpush1.bf16.msra.mxu0 0
  %1898 = vmatprep.subr.bf16.mxu0 0
  %1899 = vmatpush1.bf16.msra.mxu0 0
  %1900 = vmatprep.subr.bf16.mxu0 0
  %1901 = vmatpush1.bf16.msra.mxu0 0
  %1902 = vmatprep.subr.bf16.mxu0 0
  %1903 = vmatpush1.bf16.msra.mxu0 0
  %1904 = vmatprep.subr.bf16.mxu0 0
  %1905 = vmatpush1.bf16.msra.mxu0 0
  %1906 = vmatprep.subr.bf16.mxu0 0
  %1907 = vmatpush1.bf16.msra.mxu0 0
  %1908 = vmatprep.subr.bf16.mxu0 0
  %1909 = vmatpush1.bf16.msra.mxu0 0
  %1910 = vmatprep.subr.bf16.mxu0 0
  %1911 = vmatpush1.bf16.msra.mxu0 0
  %1912 = vmatprep.mubr.bf16.mxu0 0
  %1913 = vmatmul.mubr.bf16.gmra.mrb[0].mxu0 %v1709
  %v1914 = vpop.f32.mrb[0].mxu0
  %v1915 = vadd.f32 0.0, %v1914
  %v1916 = vpop.f32.mrb[0].mxu0
  %v1917 = vpop.f32.mrb[0].mxu0
  %v1918 = vpop.f32.mrb[0].mxu0
  %1919 = vdwg.mxu0
  %v1952 = vunpack.c.l.b16 %v1640
  %v1953 = vunpack.c.h.b16 %v1640
  %v1954 = vunpack.c.l.b16 %v1641
  %v1955 = vunpack.c.l.b16 %v1642
  %v1956 = vunpack.c.h.b16 %v1642
  %v1957 = vunpack.c.l.b16 %v1643
  %v1958 = vunpack.c.l.b16 %v1644
  %v1959 = vunpack.c.h.b16 %v1644
  %v1960 = vunpack.c.l.b16 %v1645
  %v1961 = vunpack.c.l.b16 %v1646
  %v1962 = vunpack.c.h.b16 %v1646
  %v1963 = vunpack.c.l.b16 %v1647
  %v1964 = vunpack.c.l.b16 %v1648
  %v1965 = vunpack.c.h.b16 %v1648
  %v1966 = vunpack.c.l.b16 %v1649
  %v1967 = vunpack.c.l.b16 %v1650
  %v1968 = vunpack.c.h.b16 %v1650
  %v1969 = vunpack.c.l.b16 %v1651
  %v1970 = vunpack.c.l.b16 %v1652
  %v1971 = vunpack.c.h.b16 %v1652
  %v1972 = vunpack.c.l.b16 %v1653
  %v1973 = vunpack.c.l.b16 %v1654
  %v1974 = vunpack.c.h.b16 %v1654
  %v1975 = vunpack.c.l.b16 %v1655
  %v1976 = vunpack.c.l.b16 %v1656
  %v1977 = vunpack.c.h.b16 %v1656
  %v1978 = vunpack.c.l.b16 %v1657
  %v1979 = vunpack.c.l.b16 %v1658
  %v1980 = vunpack.c.h.b16 %v1658
  %v1981 = vunpack.c.l.b16 %v1659
  %v1982 = vunpack.c.l.b16 %v1660
  %v1983 = vunpack.c.h.b16 %v1660
  %v1984 = vunpack.c.l.b16 %v1661
  %v1985 = vunpack.c.l.b16 %v1662
  %v1986 = vunpack.c.h.b16 %v1662
  %v1987 = vunpack.c.l.b16 %v1663
  %v1988 = vunpack.c.l.b16 %v1664
  %v1989 = vunpack.c.h.b16 %v1664
  %v1990 = vunpack.c.l.b16 %v1665
  %v1991 = vunpack.c.l.b16 %v1666
  %v1992 = vunpack.c.h.b16 %v1666
  %v1993 = vunpack.c.l.b16 %v1667
  %v1994 = vunpack.c.l.b16 %v1668
  %v1995 = vunpack.c.h.b16 %v1668
  %v1996 = vunpack.c.l.b16 %v1669
  %v1997 = vunpack.c.l.b16 %v1670
  %v1998 = vunpack.c.h.b16 %v1670
  %v1999 = vunpack.c.l.b16 %v1671
  %v2000 = vpack.c.b16 %v1955, %v1952
  %v2001 = vpack.c.b16 %v1956, %v1953
  %v2002 = vpack.c.b16 %v1957, %v1954
  %v2003 = vpack.c.b16 %v1961, %v1958
  %v2004 = vpack.c.b16 %v1962, %v1959
  %v2005 = vpack.c.b16 %v1963, %v1960
  %v2006 = vpack.c.b16 %v1967, %v1964
  %v2007 = vpack.c.b16 %v1968, %v1965
  %v2008 = vpack.c.b16 %v1969, %v1966
  %v2009 = vpack.c.b16 %v1973, %v1970
  %v2010 = vpack.c.b16 %v1974, %v1971
  %v2011 = vpack.c.b16 %v1975, %v1972
  %v2012 = vpack.c.b16 %v1979, %v1976
  %v2013 = vpack.c.b16 %v1980, %v1977
  %v2014 = vpack.c.b16 %v1981, %v1978
  %v2015 = vpack.c.b16 %v1985, %v1982
  %v2016 = vpack.c.b16 %v1986, %v1983
  %v2017 = vpack.c.b16 %v1987, %v1984
  %v2018 = vpack.c.b16 %v1991, %v1988
  %v2019 = vpack.c.b16 %v1992, %v1989
  %v2020 = vpack.c.b16 %v1993, %v1990
  %v2021 = vpack.c.b16 %v1997, %v1994
  %v2022 = vpack.c.b16 %v1998, %v1995
  %v2023 = vpack.c.b16 %v1999, %v1996
  %2048 = vmatprep.subr.bf16.mxu0 %v2001
  %2049 = vmatpush1.bf16.msra.mxu0 %v2000
  %2050 = vmatprep.subr.bf16.mxu0 %v2004
  %2051 = vmatpush1.bf16.msra.mxu0 %v2003
  %2052 = vmatprep.subr.bf16.mxu0 %v2007
  %2053 = vmatpush1.bf16.msra.mxu0 %v2006
  %2054 = vmatprep.subr.bf16.mxu0 %v2010
  %2055 = vmatpush1.bf16.msra.mxu0 %v2009
  %2056 = vmatprep.subr.bf16.mxu0 %v2013
  %2057 = vmatpush1.bf16.msra.mxu0 %v2012
  %2058 = vmatprep.subr.bf16.mxu0 %v2016
  %2059 = vmatpush1.bf16.msra.mxu0 %v2015
  %2060 = vmatprep.subr.bf16.mxu0 %v2019
  %2061 = vmatpush1.bf16.msra.mxu0 %v2018
  %2062 = vmatprep.subr.bf16.mxu0 %v2022
  %2063 = vmatpush1.bf16.msra.mxu0 %v2021
  %2064 = vmatprep.subr.bf16.mxu0 0
  %2065 = vmatpush1.bf16.msra.mxu0 0
  %2066 = vmatprep.subr.bf16.mxu0 0
  %2067 = vmatpush1.bf16.msra.mxu0 0
  %2068 = vmatprep.subr.bf16.mxu0 0
  %2069 = vmatpush1.bf16.msra.mxu0 0
  %2070 = vmatprep.subr.bf16.mxu0 0
  %2071 = vmatpush1.bf16.msra.mxu0 0
  %2072 = vmatprep.subr.bf16.mxu0 0
  %2073 = vmatpush1.bf16.msra.mxu0 0
  %2074 = vmatprep.subr.bf16.mxu0 0
  %2075 = vmatpush1.bf16.msra.mxu0 0
  %2076 = vmatprep.subr.bf16.mxu0 0
  %2077 = vmatpush1.bf16.msra.mxu0 0
  %2078 = vmatprep.subr.bf16.mxu0 0
  %2079 = vmatpush1.bf16.msra.mxu0 0
  %2080 = vmatprep.mubr.bf16.mxu0 0
  %2081 = vmatmul.mubr.bf16.gmra.mrb[0].mxu0 %v1639
  %v2082 = vpop.f32.mrb[0].mxu0
  %v2083 = vadd.f32 %v1874, %v2082
  %v2084 = vpop.f32.mrb[0].mxu0
  %v2085 = vadd.f32 %v1876, %v2084
  %v2086 = vpop.f32.mrb[0].mxu0
  %v2087 = vpop.f32.mrb[0].mxu0
  %2088 = vdwg.mxu0
  %2089 = vmatprep.subr.bf16.mxu0 0
  %2090 = vmatpush1.bf16.msra.mxu0 %v2002
  %2091 = vmatprep.subr.bf16.mxu0 0
  %2092 = vmatpush1.bf16.msra.mxu0 %v2005
  %2093 = vmatprep.subr.bf16.mxu0 0
  %2094 = vmatpush1.bf16.msra.mxu0 %v2008
  %2095 = vmatprep.subr.bf16.mxu0 0
  %2096 = vmatpush1.bf16.msra.mxu0 %v2011
  %2097 = vmatprep.subr.bf16.mxu0 0
  %2098 = vmatpush1.bf16.msra.mxu0 %v2014
  %2099 = vmatprep.subr.bf16.mxu0 0
  %2100 = vmatpush1.bf16.msra.mxu0 %v2017
  %2101 = vmatprep.subr.bf16.mxu0 0
  %2102 = vmatpush1.bf16.msra.mxu0 %v2020
  %2103 = vmatprep.subr.bf16.mxu0 0
  %2104 = vmatpush1.bf16.msra.mxu0 %v2023
  %2105 = vmatprep.subr.bf16.mxu0 0
  %2106 = vmatpush1.bf16.msra.mxu0 0
  %2107 = vmatprep.subr.bf16.mxu0 0
  %2108 = vmatpush1.bf16.msra.mxu0 0
  %2109 = vmatprep.subr.bf16.mxu0 0
  %2110 = vmatpush1.bf16.msra.mxu0 0
  %2111 = vmatprep.subr.bf16.mxu0 0
  %2112 = vmatpush1.bf16.msra.mxu0 0
  %2113 = vmatprep.subr.bf16.mxu0 0
  %2114 = vmatpush1.bf16.msra.mxu0 0
  %2115 = vmatprep.subr.bf16.mxu0 0
  %2116 = vmatpush1.bf16.msra.mxu0 0
  %2117 = vmatprep.subr.bf16.mxu0 0
  %2118 = vmatpush1.bf16.msra.mxu0 0
  %2119 = vmatprep.subr.bf16.mxu0 0
  %2120 = vmatpush1.bf16.msra.mxu0 0
  %2121 = vmatprep.mubr.bf16.mxu0 0
  %2122 = vmatmul.mubr.bf16.gmra.mrb[0].mxu0 %v1639
  %v2123 = vpop.f32.mrb[0].mxu0
  %v2124 = vadd.f32 %v1915, %v2123
  %v2125 = vpop.f32.mrb[0].mxu0
  %v2126 = vpop.f32.mrb[0].mxu0
  %v2127 = vpop.f32.mrb[0].mxu0
  %2128 = vdwg.mxu0
  %v2129 = vld [vmem:[#allocation4] sm:$0x4]
  %s2130 = scalar_lea.vmem %s7, 384
  %v2131 = vld [vmem:[%s2130] sm:$0xff]
  %v2132 = vld [vmem:[%s2130 + $0x8] sm:$0xf]
  %v2133 = vld [vmem:[%s2130 + $0xc] sm:$0xff]
  %v2134 = vld [vmem:[%s2130 + $0x14] sm:$0xf]
  %v2135 = vld [vmem:[%s2130 + $0x18] sm:$0xff]
  %v2136 = vld [vmem:[%s2130 + $0x20] sm:$0xf]
  %v2137 = vld [vmem:[%s2130 + $0x24] sm:$0xff]
  %v2138 = vld [vmem:[%s2130 + $0x2c] sm:$0xf]
  %v2139 = vld [vmem:[%s2130 + $0x30] sm:$0xff]
  %v2140 = vld [vmem:[%s2130 + $0x38] sm:$0xf]
  %v2141 = vld [vmem:[%s2130 + $0x3c] sm:$0xff]
  %v2142 = vld [vmem:[%s2130 + $0x44] sm:$0xf]
  %v2143 = vld [vmem:[%s2130 + $0x48] sm:$0xff]
  %v2144 = vld [vmem:[%s2130 + $0x50] sm:$0xf]
  %v2145 = vld [vmem:[%s2130 + $0x54] sm:$0xff]
  %v2146 = vld [vmem:[%s2130 + $0x5c] sm:$0xf]
  %v2147 = vld [vmem:[%s2130 + $0x60] sm:$0xff]
  %v2148 = vld [vmem:[%s2130 + $0x68] sm:$0xf]
  %v2149 = vld [vmem:[%s2130 + $0x6c] sm:$0xff]
  %v2150 = vld [vmem:[%s2130 + $0x74] sm:$0xf]
  %v2151 = vld [vmem:[%s2130 + $0x78] sm:$0xff]
  %v2152 = vld [vmem:[%s2130 + $0x80] sm:$0xf]
  %v2153 = vld [vmem:[%s2130 + $0x84] sm:$0xff]
  %v2154 = vld [vmem:[%s2130 + $0x8c] sm:$0xf]
  %v2155 = vld [vmem:[%s2130 + $0x90] sm:$0xff]
  %v2156 = vld [vmem:[%s2130 + $0x98] sm:$0xf]
  %v2157 = vld [vmem:[%s2130 + $0x9c] sm:$0xff]
  %v2158 = vld [vmem:[%s2130 + $0xa4] sm:$0xf]
  %v2159 = vld [vmem:[%s2130 + $0xa8] sm:$0xff]
  %v2160 = vld [vmem:[%s2130 + $0xb0] sm:$0xf]
  %v2161 = vld [vmem:[%s2130 + $0xb4] sm:$0xff]
  %v2162 = vld [vmem:[%s2130 + $0xbc] sm:$0xf]
  %v2164 = vunpack.c.l.b16 %v2129
  %v2165 = vpack.c.b16 %v2164, %v2164
  %v2166 = vrot.slane %v2165, 2
  %v2200 = vunpack.c.l.b16 %v2131
  %v2201 = vunpack.c.h.b16 %v2131
  %v2202 = vunpack.c.l.b16 %v2132
  %v2203 = vunpack.c.l.b16 %v2133
  %v2204 = vunpack.c.h.b16 %v2133
  %v2205 = vunpack.c.l.b16 %v2134
  %v2206 = vunpack.c.l.b16 %v2135
  %v2207 = vunpack.c.h.b16 %v2135
  %v2208 = vunpack.c.l.b16 %v2136
  %v2209 = vunpack.c.l.b16 %v2137
  %v2210 = vunpack.c.h.b16 %v2137
  %v2211 = vunpack.c.l.b16 %v2138
  %v2212 = vunpack.c.l.b16 %v2139
  %v2213 = vunpack.c.h.b16 %v2139
  %v2214 = vunpack.c.l.b16 %v2140
  %v2215 = vunpack.c.l.b16 %v2141
  %v2216 = vunpack.c.h.b16 %v2141
  %v2217 = vunpack.c.l.b16 %v2142
  %v2218 = vunpack.c.l.b16 %v2143
  %v2219 = vunpack.c.h.b16 %v2143
  %v2220 = vunpack.c.l.b16 %v2144
  %v2221 = vunpack.c.l.b16 %v2145
  %v2222 = vunpack.c.h.b16 %v2145
  %v2223 = vunpack.c.l.b16 %v2146
  %v2224 = vunpack.c.l.b16 %v2147
  %v2225 = vunpack.c.h.b16 %v2147
  %v2226 = vunpack.c.l.b16 %v2148
  %v2227 = vunpack.c.l.b16 %v2149
  %v2228 = vunpack.c.h.b16 %v2149
  %v2229 = vunpack.c.l.b16 %v2150
  %v2230 = vunpack.c.l.b16 %v2151
  %v2231 = vunpack.c.h.b16 %v2151
  %v2232 = vunpack.c.l.b16 %v2152
  %v2233 = vunpack.c.l.b16 %v2153
  %v2234 = vunpack.c.h.b16 %v2153
  %v2235 = vunpack.c.l.b16 %v2154
  %v2236 = vunpack.c.l.b16 %v2155
  %v2237 = vunpack.c.h.b16 %v2155
  %v2238 = vunpack.c.l.b16 %v2156
  %v2239 = vunpack.c.l.b16 %v2157
  %v2240 = vunpack.c.h.b16 %v2157
  %v2241 = vunpack.c.l.b16 %v2158
  %v2242 = vunpack.c.l.b16 %v2159
  %v2243 = vunpack.c.h.b16 %v2159
  %v2244 = vunpack.c.l.b16 %v2160
  %v2245 = vunpack.c.l.b16 %v2161
  %v2246 = vunpack.c.h.b16 %v2161
  %v2247 = vunpack.c.l.b16 %v2162
  %v2248 = vpack.c.b16 %v2203, %v2200
  %v2249 = vpack.c.b16 %v2204, %v2201
  %v2250 = vpack.c.b16 %v2205, %v2202
  %v2251 = vpack.c.b16 %v2209, %v2206
  %v2252 = vpack.c.b16 %v2210, %v2207
  %v2253 = vpack.c.b16 %v2211, %v2208
  %v2254 = vpack.c.b16 %v2215, %v2212
  %v2255 = vpack.c.b16 %v2216, %v2213
  %v2256 = vpack.c.b16 %v2217, %v2214
  %v2257 = vpack.c.b16 %v2221, %v2218
  %v2258 = vpack.c.b16 %v2222, %v2219
  %v2259 = vpack.c.b16 %v2223, %v2220
  %v2260 = vpack.c.b16 %v2227, %v2224
  %v2261 = vpack.c.b16 %v2228, %v2225
  %v2262 = vpack.c.b16 %v2229, %v2226
  %v2263 = vpack.c.b16 %v2233, %v2230
  %v2264 = vpack.c.b16 %v2234, %v2231
  %v2265 = vpack.c.b16 %v2235, %v2232
  %v2266 = vpack.c.b16 %v2239, %v2236
  %v2267 = vpack.c.b16 %v2240, %v2237
  %v2268 = vpack.c.b16 %v2241, %v2238
  %v2269 = vpack.c.b16 %v2245, %v2242
  %v2270 = vpack.c.b16 %v2246, %v2243
  %v2271 = vpack.c.b16 %v2247, %v2244
  %2296 = vmatprep.subr.bf16.mxu0 %v2249
  %2297 = vmatpush1.bf16.msra.mxu0 %v2248
  %2298 = vmatprep.subr.bf16.mxu0 %v2252
  %2299 = vmatpush1.bf16.msra.mxu0 %v2251
  %2300 = vmatprep.subr.bf16.mxu0 %v2255
  %2301 = vmatpush1.bf16.msra.mxu0 %v2254
  %2302 = vmatprep.subr.bf16.mxu0 %v2258
  %2303 = vmatpush1.bf16.msra.mxu0 %v2257
  %2304 = vmatprep.subr.bf16.mxu0 %v2261
  %2305 = vmatpush1.bf16.msra.mxu0 %v2260
  %2306 = vmatprep.subr.bf16.mxu0 %v2264
  %2307 = vmatpush1.bf16.msra.mxu0 %v2263
  %2308 = vmatprep.subr.bf16.mxu0 %v2267
  %2309 = vmatpush1.bf16.msra.mxu0 %v2266
  %2310 = vmatprep.subr.bf16.mxu0 %v2270
  %2311 = vmatpush1.bf16.msra.mxu0 %v2269
  %2312 = vmatprep.subr.bf16.mxu0 0
  %2313 = vmatpush1.bf16.msra.mxu0 0
  %2314 = vmatprep.subr.bf16.mxu0 0
  %2315 = vmatpush1.bf16.msra.mxu0 0
  %2316 = vmatprep.subr.bf16.mxu0 0
  %2317 = vmatpush1.bf16.msra.mxu0 0
  %2318 = vmatprep.subr.bf16.mxu0 0
  %2319 = vmatpush1.bf16.msra.mxu0 0
  %2320 = vmatprep.subr.bf16.mxu0 0
  %2321 = vmatpush1.bf16.msra.mxu0 0
  %2322 = vmatprep.subr.bf16.mxu0 0
  %2323 = vmatpush1.bf16.msra.mxu0 0
  %2324 = vmatprep.subr.bf16.mxu0 0
  %2325 = vmatpush1.bf16.msra.mxu0 0
  %2326 = vmatprep.subr.bf16.mxu0 0
  %2327 = vmatpush1.bf16.msra.mxu0 0
  %2328 = vmatprep.mubr.bf16.mxu0 0
  %2329 = vmatmul.mubr.bf16.gmra.mrb[0].mxu0 %v2166
  %v2330 = vpop.f32.mrb[0].mxu0
  %v2331 = vadd.f32 0.0, %v2330
  %v2332 = vpop.f32.mrb[0].mxu0
  %v2333 = vadd.f32 0.0, %v2332
  %v2334 = vpop.f32.mrb[0].mxu0
  %v2335 = vpop.f32.mrb[0].mxu0
  %2336 = vdwg.mxu0
  %2337 = vmatprep.subr.bf16.mxu0 0
  %2338 = vmatpush1.bf16.msra.mxu0 %v2250
  %2339 = vmatprep.subr.bf16.mxu0 0
  %2340 = vmatpush1.bf16.msra.mxu0 %v2253
  %2341 = vmatprep.subr.bf16.mxu0 0
  %2342 = vmatpush1.bf16.msra.mxu0 %v2256
  %2343 = vmatprep.subr.bf16.mxu0 0
  %2344 = vmatpush1.bf16.msra.mxu0 %v2259
  %2345 = vmatprep.subr.bf16.mxu0 0
  %2346 = vmatpush1.bf16.msra.mxu0 %v2262
  %2347 = vmatprep.subr.bf16.mxu0 0
  %2348 = vmatpush1.bf16.msra.mxu0 %v2265
  %2349 = vmatprep.subr.bf16.mxu0 0
  %2350 = vmatpush1.bf16.msra.mxu0 %v2268
  %2351 = vmatprep.subr.bf16.mxu0 0
  %2352 = vmatpush1.bf16.msra.mxu0 %v2271
  %2353 = vmatprep.subr.bf16.mxu0 0
  %2354 = vmatpush1.bf16.msra.mxu0 0
  %2355 = vmatprep.subr.bf16.mxu0 0
  %2356 = vmatpush1.bf16.msra.mxu0 0
  %2357 = vmatprep.subr.bf16.mxu0 0
  %2358 = vmatpush1.bf16.msra.mxu0 0
  %2359 = vmatprep.subr.bf16.mxu0 0
  %2360 = vmatpush1.bf16.msra.mxu0 0
  %2361 = vmatprep.subr.bf16.mxu0 0
  %2362 = vmatpush1.bf16.msra.mxu0 0
  %2363 = vmatprep.subr.bf16.mxu0 0
  %2364 = vmatpush1.bf16.msra.mxu0 0
  %2365 = vmatprep.subr.bf16.mxu0 0
  %2366 = vmatpush1.bf16.msra.mxu0 0
  %2367 = vmatprep.subr.bf16.mxu0 0
  %2368 = vmatpush1.bf16.msra.mxu0 0
  %2369 = vmatprep.mubr.bf16.mxu0 0
  %2370 = vmatmul.mubr.bf16.gmra.mrb[0].mxu0 %v2166
  %v2371 = vpop.f32.mrb[0].mxu0
  %v2372 = vadd.f32 0.0, %v2371
  %v2373 = vpop.f32.mrb[0].mxu0
  %v2374 = vpop.f32.mrb[0].mxu0
  %v2375 = vpop.f32.mrb[0].mxu0
  %2376 = vdwg.mxu0
  %v2377 = vadd.f32 %v2083, %v2331
  %v2378 = vadd.f32 %v2085, %v2333
  %v2379 = vadd.f32 %v2124, %v2372
  %v2380 = vld [vmem:[%s8] sm:$0x7]
  %v2382 = vlaneseq
  %v2383 = vshrl.u32 %v2382, 7
  %v2384 = vsub.s32 0, %v2383
  %v2385 = vrot.slane %v2380, %v2384
  %v2386 = vlaneseq
  %v2387 = vshrl.u32 %v2386, 7
  %v2388 = vsub.s32 1, %v2387
  %v2389 = vrot.slane %v2380, %v2388
  %v2390 = vlaneseq
  %v2391 = vshrl.u32 %v2390, 7
  %v2392 = vsub.s32 2, %v2391
  %v2393 = vrot.slane %v2380, %v2392
  %v2397 = vadd.f32 %v2377, %v2385
  %v2398 = vadd.f32 %v2378, %v2389
  %v2399 = vadd.f32 %v2379, %v2393
  %v2400 = vmax.f32 %v2397, 0.0
  %v2401 = vmax.f32 %v2398, 0.0
  %v2402 = vmax.f32 %v2399, 0.0
  %v2403 = vpack.c.bf16 %v2400, %v2400
  %v2404 = vpack.c.bf16 %v2401, %v2401
  %v2405 = vpack.c.bf16 %v2402, %v2402
  %v2406 = vld [vmem:[%s9] sm:$0xf]
  %v2407 = vld [vmem:[%s9 + $0x4] sm:$0xf]
  %v2408 = vld [vmem:[%s9 + $0x8] sm:$0xf]
  %v2409 = vld [vmem:[%s9 + $0xc] sm:$0xf]
  %v2410 = vld [vmem:[%s9 + $0x10] sm:$0xf]
  %v2411 = vld [vmem:[%s9 + $0x14] sm:$0xf]
  %v2412 = vld [vmem:[%s9 + $0x18] sm:$0xf]
  %v2413 = vld [vmem:[%s9 + $0x1c] sm:$0xf]
  %v2414 = vld [vmem:[%s9 + $0x20] sm:$0xf]
  %v2415 = vld [vmem:[%s9 + $0x24] sm:$0xf]
  %v2416 = vld [vmem:[%s9 + $0x28] sm:$0xf]
  %v2417 = vld [vmem:[%s9 + $0x2c] sm:$0xf]
  %v2418 = vld [vmem:[%s9 + $0x30] sm:$0xf]
  %v2419 = vld [vmem:[%s9 + $0x34] sm:$0xf]
  %v2420 = vld [vmem:[%s9 + $0x38] sm:$0xf]
  %v2421 = vld [vmem:[%s9 + $0x3c] sm:$0xf]
  %v2422 = vld [vmem:[%s9 + $0x40] sm:$0xf]
  %v2423 = vld [vmem:[%s9 + $0x44] sm:$0xf]
  %v2424 = vld [vmem:[%s9 + $0x48] sm:$0xf]
  %v2425 = vld [vmem:[%s9 + $0x4c] sm:$0xf]
  %v2426 = vld [vmem:[%s9 + $0x50] sm:$0xf]
  %v2427 = vld [vmem:[%s9 + $0x54] sm:$0xf]
  %v2428 = vld [vmem:[%s9 + $0x58] sm:$0xf]
  %v2429 = vld [vmem:[%s9 + $0x5c] sm:$0xf]
  %v2430 = vld [vmem:[%s9 + $0x60] sm:$0xf]
  %v2431 = vld [vmem:[%s9 + $0x64] sm:$0xf]
  %v2432 = vld [vmem:[%s9 + $0x68] sm:$0xf]
  %v2433 = vld [vmem:[%s9 + $0x6c] sm:$0xf]
  %v2434 = vld [vmem:[%s9 + $0x70] sm:$0xf]
  %v2435 = vld [vmem:[%s9 + $0x74] sm:$0xf]
  %v2436 = vld [vmem:[%s9 + $0x78] sm:$0xf]
  %v2437 = vld [vmem:[%s9 + $0x7c] sm:$0xf]
  %v2438 = vld [vmem:[%s9 + $0x80] sm:$0xf]
  %v2439 = vld [vmem:[%s9 + $0x84] sm:$0xf]
  %v2440 = vld [vmem:[%s9 + $0x88] sm:$0xf]
  %v2441 = vld [vmem:[%s9 + $0x8c] sm:$0xf]
  %v2442 = vld [vmem:[%s9 + $0x90] sm:$0xf]
  %v2443 = vld [vmem:[%s9 + $0x94] sm:$0xf]
  %v2444 = vld [vmem:[%s9 + $0x98] sm:$0xf]
  %v2445 = vld [vmem:[%s9 + $0x9c] sm:$0xf]
  %v2446 = vld [vmem:[%s9 + $0xa0] sm:$0xf]
  %v2447 = vld [vmem:[%s9 + $0xa4] sm:$0xf]
  %v2448 = vld [vmem:[%s9 + $0xa8] sm:$0xf]
  %v2449 = vld [vmem:[%s9 + $0xac] sm:$0xf]
  %v2450 = vld [vmem:[%s9 + $0xb0] sm:$0xf]
  %v2451 = vld [vmem:[%s9 + $0xb4] sm:$0xf]
  %v2452 = vld [vmem:[%s9 + $0xb8] sm:$0xf]
  %v2453 = vld [vmem:[%s9 + $0xbc] sm:$0xf]
  %v2454 = vld [vmem:[%s10] sm:$0x1]
  %v2456 = vlaneseq
  %v2457 = vshrl.u32 %v2456, 7
  %v2458 = vsub.s32 0, %v2457
  %v2459 = vrot.slane %v2454, %v2458
  %v2509 = vunpack.c.l.b16 %v2406
  %v2510 = vunpack.c.l.b16 %v2407
  %v2511 = vunpack.c.l.b16 %v2408
  %v2512 = vunpack.c.l.b16 %v2409
  %v2513 = vunpack.c.l.b16 %v2410
  %v2514 = vunpack.c.l.b16 %v2411
  %v2515 = vunpack.c.l.b16 %v2412
  %v2516 = vunpack.c.l.b16 %v2413
  %v2517 = vunpack.c.l.b16 %v2414
  %v2518 = vunpack.c.l.b16 %v2415
  %v2519 = vunpack.c.l.b16 %v2416
  %v2520 = vunpack.c.l.b16 %v2417
  %v2521 = vunpack.c.l.b16 %v2418
  %v2522 = vunpack.c.l.b16 %v2419
  %v2523 = vunpack.c.l.b16 %v2420
  %v2524 = vunpack.c.l.b16 %v2421
  %v2525 = vunpack.c.l.b16 %v2422
  %v2526 = vunpack.c.l.b16 %v2423
  %v2527 = vunpack.c.l.b16 %v2424
  %v2528 = vunpack.c.l.b16 %v2425
  %v2529 = vunpack.c.l.b16 %v2426
  %v2530 = vunpack.c.l.b16 %v2427
  %v2531 = vunpack.c.l.b16 %v2428
  %v2532 = vunpack.c.l.b16 %v2429
  %v2533 = vunpack.c.l.b16 %v2430
  %v2534 = vunpack.c.l.b16 %v2431
  %v2535 = vunpack.c.l.b16 %v2432
  %v2536 = vunpack.c.l.b16 %v2433
  %v2537 = vunpack.c.l.b16 %v2434
  %v2538 = vunpack.c.l.b16 %v2435
  %v2539 = vunpack.c.l.b16 %v2436
  %v2540 = vunpack.c.l.b16 %v2437
  %v2541 = vunpack.c.l.b16 %v2438
  %v2542 = vunpack.c.l.b16 %v2439
  %v2543 = vunpack.c.l.b16 %v2440
  %v2544 = vunpack.c.l.b16 %v2441
  %v2545 = vunpack.c.l.b16 %v2442
  %v2546 = vunpack.c.l.b16 %v2443
  %v2547 = vunpack.c.l.b16 %v2444
  %v2548 = vunpack.c.l.b16 %v2445
  %v2549 = vunpack.c.l.b16 %v2446
  %v2550 = vunpack.c.l.b16 %v2447
  %v2551 = vunpack.c.l.b16 %v2448
  %v2552 = vunpack.c.l.b16 %v2449
  %v2553 = vunpack.c.l.b16 %v2450
  %v2554 = vunpack.c.l.b16 %v2451
  %v2555 = vunpack.c.l.b16 %v2452
  %v2556 = vunpack.c.l.b16 %v2453
  %v2557 = vpack.c.b16 %v2510, %v2509
  %v2558 = vpack.c.b16 %v2512, %v2511
  %v2559 = vpack.c.b16 %v2514, %v2513
  %v2560 = vpack.c.b16 %v2516, %v2515
  %v2561 = vpack.c.b16 %v2518, %v2517
  %v2562 = vpack.c.b16 %v2520, %v2519
  %v2563 = vpack.c.b16 %v2522, %v2521
  %v2564 = vpack.c.b16 %v2524, %v2523
  %v2565 = vpack.c.b16 %v2526, %v2525
  %v2566 = vpack.c.b16 %v2528, %v2527
  %v2567 = vpack.c.b16 %v2530, %v2529
  %v2568 = vpack.c.b16 %v2532, %v2531
  %v2569 = vpack.c.b16 %v2534, %v2533
  %v2570 = vpack.c.b16 %v2536, %v2535
  %v2571 = vpack.c.b16 %v2538, %v2537
  %v2572 = vpack.c.b16 %v2540, %v2539
  %v2573 = vpack.c.b16 %v2542, %v2541
  %v2574 = vpack.c.b16 %v2544, %v2543
  %v2575 = vpack.c.b16 %v2546, %v2545
  %v2576 = vpack.c.b16 %v2548, %v2547
  %v2577 = vpack.c.b16 %v2550, %v2549
  %v2578 = vpack.c.b16 %v2552, %v2551
  %v2579 = vpack.c.b16 %v2554, %v2553
  %v2580 = vpack.c.b16 %v2556, %v2555
  %2605 = vmatprep.subr.bf16.mxu0 0
  %2606 = vmatpush1.bf16.msra.mxu0 %v2557
  %2607 = vmatprep.subr.bf16.mxu0 0
  %2608 = vmatpush1.bf16.msra.mxu0 %v2558
  %2609 = vmatprep.subr.bf16.mxu0 0
  %2610 = vmatpush1.bf16.msra.mxu0 %v2559
  %2611 = vmatprep.subr.bf16.mxu0 0
  %2612 = vmatpush1.bf16.msra.mxu0 %v2560
  %2613 = vmatprep.subr.bf16.mxu0 0
  %2614 = vmatpush1.bf16.msra.mxu0 %v2561
  %2615 = vmatprep.subr.bf16.mxu0 0
  %2616 = vmatpush1.bf16.msra.mxu0 %v2562
  %2617 = vmatprep.subr.bf16.mxu0 0
  %2618 = vmatpush1.bf16.msra.mxu0 %v2563
  %2619 = vmatprep.subr.bf16.mxu0 0
  %2620 = vmatpush1.bf16.msra.mxu0 %v2564
  %2621 = vmatprep.subr.bf16.mxu0 0
  %2622 = vmatpush1.bf16.msra.mxu0 %v2565
  %2623 = vmatprep.subr.bf16.mxu0 0
  %2624 = vmatpush1.bf16.msra.mxu0 %v2566
  %2625 = vmatprep.subr.bf16.mxu0 0
  %2626 = vmatpush1.bf16.msra.mxu0 %v2567
  %2627 = vmatprep.subr.bf16.mxu0 0
  %2628 = vmatpush1.bf16.msra.mxu0 %v2568
  %2629 = vmatprep.subr.bf16.mxu0 0
  %2630 = vmatpush1.bf16.msra.mxu0 %v2569
  %2631 = vmatprep.subr.bf16.mxu0 0
  %2632 = vmatpush1.bf16.msra.mxu0 %v2570
  %2633 = vmatprep.subr.bf16.mxu0 0
  %2634 = vmatpush1.bf16.msra.mxu0 %v2571
  %2635 = vmatprep.subr.bf16.mxu0 0
  %2636 = vmatpush1.bf16.msra.mxu0 %v2572
  %2637 = vmatprep.mubr.bf16.mxu0 %v2404
  %2638 = vmatmul.mubr.bf16.gmra.mrb[0].mxu0 %v2403
  %v2639 = vpop.f32.mrb[0].mxu0
  %v2640 = vadd.f32 %v2459, %v2639
  %v2641 = vpop.f32.mrb[0].mxu0
  %v2642 = vpop.f32.mrb[0].mxu0
  %v2643 = vpop.f32.mrb[0].mxu0
  %2644 = vdwg.mxu0
  %2645 = vmatprep.subr.bf16.mxu0 0
  %2646 = vmatpush1.bf16.msra.mxu0 %v2573
  %2647 = vmatprep.subr.bf16.mxu0 0
  %2648 = vmatpush1.bf16.msra.mxu0 %v2574
  %2649 = vmatprep.subr.bf16.mxu0 0
  %2650 = vmatpush1.bf16.msra.mxu0 %v2575
  %2651 = vmatprep.subr.bf16.mxu0 0
  %2652 = vmatpush1.bf16.msra.mxu0 %v2576
  %2653 = vmatprep.subr.bf16.mxu0 0
  %2654 = vmatpush1.bf16.msra.mxu0 %v2577
  %2655 = vmatprep.subr.bf16.mxu0 0
  %2656 = vmatpush1.bf16.msra.mxu0 %v2578
  %2657 = vmatprep.subr.bf16.mxu0 0
  %2658 = vmatpush1.bf16.msra.mxu0 %v2579
  %2659 = vmatprep.subr.bf16.mxu0 0
  %2660 = vmatpush1.bf16.msra.mxu0 %v2580
  %2661 = vmatprep.subr.bf16.mxu0 0
  %2662 = vmatpush1.bf16.msra.mxu0 0
  %2663 = vmatprep.subr.bf16.mxu0 0
  %2664 = vmatpush1.bf16.msra.mxu0 0
  %2665 = vmatprep.subr.bf16.mxu0 0
  %2666 = vmatpush1.bf16.msra.mxu0 0
  %2667 = vmatprep.subr.bf16.mxu0 0
  %2668 = vmatpush1.bf16.msra.mxu0 0
  %2669 = vmatprep.subr.bf16.mxu0 0
  %2670 = vmatpush1.bf16.msra.mxu0 0
  %2671 = vmatprep.subr.bf16.mxu0 0
  %2672 = vmatpush1.bf16.msra.mxu0 0
  %2673 = vmatprep.subr.bf16.mxu0 0
  %2674 = vmatpush1.bf16.msra.mxu0 0
  %2675 = vmatprep.subr.bf16.mxu0 0
  %2676 = vmatpush1.bf16.msra.mxu0 0
  %2677 = vmatprep.mubr.bf16.mxu0 0
  %2678 = vmatmul.mubr.bf16.gmra.mrb[0].mxu0 %v2405
  %v2679 = vpop.f32.mrb[0].mxu0
  %v2680 = vadd.f32 %v2640, %v2679
  %v2681 = vpop.f32.mrb[0].mxu0
  %v2682 = vpop.f32.mrb[0].mxu0
  %v2683 = vpop.f32.mrb[0].mxu0
  %2684 = vdwg.mxu0
  %v2685 = vlaneseq
  %v2686 = vand.u32 %v2685, 127
  %vm2687 = vcmp.lt.s32.totalorder %v2686, 3
  %v2688 = vsel %vm2687, %v2680, -1e+30
  %vm2689 = vcmask 1041408
  %v2690 = vsel %vm2689, %v2688, -inf
  %2691 = vmax.xlane.f32.xlu0 %v2690
  %v2692 = vpop.xlane.xlu0 %2691
  %v2693 = vsub.f32 %v2688, %v2692
  %v2694 = vmul.f32 %v2693, 1.442695
  %v2695 = vpow.pop %v2694
  %v2696 = vsel %vm2689, %v2695, 0.0
  %2697 = vadd.xlane.f32.xlu0 %v2696
  %v2698 = vpop.xlane.xlu0 %2697
  %v2699 = vlog2.pop %v2698
  %v2700 = vmul.f32 %v2699, 0.6931472
  %v2701 = vadd.f32 %v2692, %v2700
  %v2702 = vsub.f32 %v2680, %v2701
  %v2703 = vsel %vm2687, %v2702, %v2680
  %2704 = vst [vmem:[%s11] sm:$0x3] %v2703
  // Predicated region
  $region46: #{image_ac_forward.1} parent=0 // pred_check
    _
  $region47: #{image_ac_forward.1} parent=0 // pred_check_branch
    %2706 = sbr.rel (0) target = $region49
  $region48: #{image_ac_forward.1} parent=0 // pred_region
    _
  $region49: #{image_ac_forward.1} parent=0 // pred_fallthru
    _
  // Predicated region
  $region50: #{image_ac_forward.1} parent=0 // pred_check
    _
  $region51: #{image_ac_forward.1} parent=0 // pred_check_branch
    %2708 = sbr.rel (0) target = $region53
  $region52: #{image_ac_forward.1} parent=0 // pred_region
    _
  $region53: #{image_ac_forward.1} parent=0 // pred_fallthru
    _

</llo_original>
